<compile_context>
chip_gen: v7x
topology: tpu7x:2x2x1
jax: 0.10.0
libtpu: 0.0.40
codegen_flags: <defaults>
</compile_context>

<pallas_src>
import functools
import math

import jax
import jax.numpy as jnp
from jax.experimental import pallas as pl
from jax.experimental.pallas import tpu as pltpu


def _encoder_layer_kernel(x_ref, wq_ref, bq_ref, wk_ref, bk_ref, wv_ref, bv_ref,
                          w1_ref, b1_ref, w2_ref, b2_ref, out_ref,
                          *, dh, topk, ksize):
    x = x_ref[...]                                   # (L, C) f32, C = NP * D (lane-packed batch)
    L, C = x.shape
    f32 = jnp.float32

    # --- AutoCorrelation: q/k/v projections (MXU, full lane width) ---
    q = jnp.dot(x, wq_ref[...], preferred_element_type=f32) + bq_ref[...]
    k = jnp.dot(x, wk_ref[...], preferred_element_type=f32) + bk_ref[...]
    v = jnp.dot(x, wv_ref[...], preferred_element_type=f32) + bv_ref[...]

    t_iota = jax.lax.broadcasted_iota(jnp.int32, (L, C), 0)        # time index per (t, col)
    j_iota = jax.lax.broadcasted_iota(jnp.int32, (1, C), 1) % dh   # within-head feature index
    row_iota = jax.lax.broadcasted_iota(jnp.int32, (L, L), 0)
    col_iota = jax.lax.broadcasted_iota(jnp.int32, (L, L), 1)

    # --- circular cross-correlation for all heads / packed batches at once ---
    # corr[tau, c] = sum_s q[s, c] * k[(s - tau) % L, c]
    # The sum over s is done as a (L, L) @ (L, C) matmul with an all-ones selector row
    # (MXU), accumulating into one flat register: no row list, no sublane concat.
    corr = jnp.zeros((L, C), f32)
    for tau in range(L):                              # TODO(synk): lax.fori_loop at large L
        k_rot = pltpu.roll(k, shift=tau, axis=0)      # k_rot[s] = k[(s - tau) % L]
        sel = (row_iota == tau).astype(f32)           # ones in row tau, zero elsewhere
        corr = corr + jnp.dot(sel, q * k_rot, preferred_element_type=f32)

    # --- top-k along the time axis, per column (first-occurrence tie break) ---
    vals, idxs = [], []
    work = corr
    for _ in range(topk):
        m = jnp.max(work, axis=0, keepdims=True)                               # (1, C)
        am = jnp.min(jnp.where(work == m, t_iota, L), axis=0, keepdims=True)   # (1, C) int32
        vals.append(m)
        idxs.append(am)
        work = jnp.where(t_iota == am, -jnp.inf, work)

    # softmax over the k selected values (vals[0] is already the per-column max)
    exps = [jnp.exp(vv - vals[0]) for vv in vals]
    denom = exps[0]
    for e in exps[1:]:
        denom = denom + e
    inv_denom = pl.reciprocal(denom, approx=False)    # exact; approx=True is a free EUP variant

    # --- fused gather: one weighted one-hot mask, one MXU reduction ---
    # mask[t, c] = sum_i softmax_i[c] * (t == clamp(I_topk[i, c] + j(c), L - 1))
    mask = jnp.zeros((L, C), f32)
    for i in range(topk):
        g = jnp.minimum(idxs[i] + j_iota, L - 1)                     # (1, C)
        mask = mask + jnp.where(t_iota == g, exps[i] * inv_denom, 0.0)
    ones_LL = jnp.ones((L, L), f32)
    # every output row equals the column sum -> result is already broadcast over time
    ac = jnp.dot(ones_LL, v * mask, preferred_element_type=f32)      # (L, C)

    # --- SeriesDecomp moving average as a banded (L, L) matmul (MXU) ---
    # AvgPool1d(kernel=ksize, stride=1, pad=ksize//2, count_include_pad=True), zero padding.
    p = ksize // 2
    band = jnp.where(jnp.abs(col_iota - row_iota) <= p, 1.0 / ksize, 0.0).astype(f32)

    # --- encoder layer: residual + decomposition (seasonal part), feed-forward ---
    y1 = ac + x
    xs1 = y1 - jnp.dot(band, y1, preferred_element_type=f32)

    hid = jnp.maximum(
        jnp.dot(xs1, w1_ref[...], preferred_element_type=f32) + b1_ref[...], 0.0)
    ff = jnp.dot(hid, w2_ref[...], preferred_element_type=f32) + b2_ref[...]
    y2 = ff + xs1                                     # dropout == identity (eval)
    out_ref[...] = y2 - jnp.dot(band, y2, preferred_element_type=f32)


def autoformer_encoder_layer(x, params, *, heads, c, ksize, lane_pack=None):
    B, L, D = x.shape
    dh = D // heads
    topk = int(c * math.log(L))

    # Lane-packing factor: pack NP batch elements along lanes so blocks are ~128 lanes wide.
    if lane_pack is None:
        lane_pack = max(1, min(B, 128 // D)) if D < 128 else 1
        while B % lane_pack:
            lane_pack -= 1
    NP = lane_pack
    assert B % NP == 0, "batch must be divisible by the lane-packing factor"
    G = B // NP
    cols = NP * D

    # Host-side layout plumbing: (B, L, D) -> (G, L, NP*D), batch-major along lanes.
    xp = x.reshape(G, NP, L, D).transpose(0, 2, 1, 3).reshape(G, L, cols)

    if NP > 1:
        def pack_w(w):
            return jax.scipy.linalg.block_diag(*([w] * NP))

        def pack_b(b):
            return jnp.tile(b, (1, NP))
    else:
        pack_w = lambda w: w
        pack_b = lambda b: b

    kernel = functools.partial(_encoder_layer_kernel, dh=dh, topk=topk, ksize=ksize)

    def wspec(shape):
        return pl.BlockSpec(shape, lambda g, _s=shape: (0,) * len(_s))

    out_p = pl.pallas_call(
        kernel,
        out_shape=jax.ShapeDtypeStruct((G, L, cols), jnp.float32),
        grid=(G,),
        in_specs=[
            pl.BlockSpec((None, L, cols), lambda g: (g, 0, 0)),   # x (group dim squeezed)
            wspec((cols, cols)), wspec((1, cols)),                # q_proj
            wspec((cols, cols)), wspec((1, cols)),                # k_proj
            wspec((cols, cols)), wspec((1, cols)),                # v_proj
            wspec((cols, cols)), wspec((1, cols)),                # ff linear 1
            wspec((cols, cols)), wspec((1, cols)),                # ff linear 2
        ],
        out_specs=pl.BlockSpec((None, L, cols), lambda g: (g, 0, 0)),
        compiler_params=pltpu.CompilerParams(dimension_semantics=("parallel",)),
    )(xp,
      pack_w(params["wq_t"]), pack_b(params["bq"]),
      pack_w(params["wk_t"]), pack_b(params["bk"]),
      pack_w(params["wv_t"]), pack_b(params["bv"]),
      pack_w(params["w1_t"]), pack_b(params["b1"]),
      pack_w(params["w2_t"]), pack_b(params["b2"]))

    return out_p.reshape(G, L, NP, D).transpose(0, 2, 1, 3).reshape(B, L, D)


def reference_forward(x, p, *, heads, c, ksize):
    """Pure-JAX reference mirroring the (fixed-shape) PyTorch semantics, using jnp.fft."""
    B, L, D = x.shape
    dh = D // heads
    topk = int(c * math.log(L))

    def lin(z, w_t, b):
        return z @ w_t + b

    q = lin(x, p["wq_t"], p["bq"]).reshape(B, L, heads, dh).transpose(0, 2, 1, 3)
    k = lin(x, p["wk_t"], p["bk"]).reshape(B, L, heads, dh).transpose(0, 2, 1, 3)
    v = lin(x, p["wv_t"], p["bv"]).reshape(B, L, heads, dh).transpose(0, 2, 1, 3)

    qf = jnp.fft.rfft(q, axis=2)
    kf = jnp.fft.rfft(k, axis=2)
    corr = jnp.fft.irfft(qf * jnp.conj(kf), n=L, axis=2)       # (B, h, L, dh)

    corr_l = jnp.moveaxis(corr, 2, -1)                         # (B, h, dh, L)
    w_v, i_v = jax.lax.top_k(corr_l, topk)
    w_topk = jnp.moveaxis(w_v, -1, 2)                          # (B, h, topk, dh)
    i_topk = jnp.moveaxis(i_v, -1, 2)
    w_sm = jax.nn.softmax(w_topk, axis=2)

    j = jnp.arange(dh)[None, None, :]
    r = jnp.zeros((B, heads, dh), jnp.float32)
    for i in range(topk):
        g = jnp.minimum(i_topk[:, :, i, :] + j, L - 1)
        gathered = jnp.take_along_axis(v, g[:, :, None, :], axis=2)[:, :, 0, :]
        r = r + w_sm[:, :, i, :] * gathered
    ac = jnp.broadcast_to(r[:, :, None, :], (B, heads, L, dh))
    ac = ac.transpose(0, 2, 1, 3).reshape(B, L, D)

    def mov_avg(y):
        pd = ksize // 2
        yp = jnp.pad(y, ((0, 0), (pd, pd), (0, 0)))
        return sum(yp[:, d:d + L, :] for d in range(ksize)) / ksize

    y1 = ac + x
    xs1 = y1 - mov_avg(y1)
    ff = jnp.maximum(lin(xs1, p["w1_t"], p["b1"]), 0.0) @ p["w2_t"] + p["b2"]
    y2 = ff + xs1
    return y2 - mov_avg(y2)


if __name__ == "__main__":
    # d_head = D // H = 8 == L (required by the reference's broadcasting);
    # B=4 so the lane-packed block is exactly (L, 4*D) = (8, 128).
    B, L, D, H, C_FACTOR, K = 4, 8, 32, 4, 2, 3
    assert D % H == 0 and D // H == L

    key = jax.random.PRNGKey(0)
    keys = jax.random.split(key, 11)

    def w(kk):
        return jax.random.normal(kk, (D, D), jnp.float32) * (1.0 / math.sqrt(D))

    def bvec(kk):
        return jax.random.normal(kk, (1, D), jnp.float32) * 0.01

    params = {
        "wq_t": w(keys[0]), "bq": bvec(keys[1]),
        "wk_t": w(keys[2]), "bk": bvec(keys[3]),
        "wv_t": w(keys[4]), "bv": bvec(keys[5]),
        "w1_t": w(keys[6]), "b1": bvec(keys[7]),
        "w2_t": w(keys[8]), "b2": bvec(keys[9]),
    }
    x = jax.random.normal(keys[10], (B, L, D), jnp.float32)

    out = autoformer_encoder_layer(x, params, heads=H, c=C_FACTOR, ksize=K)
    out = jax.block_until_ready(out)

    ref = reference_forward(x, params, heads=H, c=C_FACTOR, ksize=K)
    assert out.shape == (B, L, D)
    max_err = float(jnp.max(jnp.abs(out - ref)))
    assert jnp.allclose(out, ref, atol=1e-3, rtol=1e-3), f"max abs err {max_err}"
    print("KERNEL_OK")
</pallas_src>

<mosaic_0001>
module attributes {stable_mosaic.version = 11 : i64} {
  func.func @_encoder_layer_kernel(%arg0: i32, %arg1: memref<1x8x128xf32, #tpu.memory_space<vmem>>, %arg2: memref<128x128xf32, #tpu.memory_space<vmem>>, %arg3: memref<1x128xf32, #tpu.memory_space<vmem>>, %arg4: memref<128x128xf32, #tpu.memory_space<vmem>>, %arg5: memref<1x128xf32, #tpu.memory_space<vmem>>, %arg6: memref<128x128xf32, #tpu.memory_space<vmem>>, %arg7: memref<1x128xf32, #tpu.memory_space<vmem>>, %arg8: memref<128x128xf32, #tpu.memory_space<vmem>>, %arg9: memref<1x128xf32, #tpu.memory_space<vmem>>, %arg10: memref<128x128xf32, #tpu.memory_space<vmem>>, %arg11: memref<1x128xf32, #tpu.memory_space<vmem>>, %arg12: memref<1x8x128xf32, #tpu.memory_space<vmem>>) attributes {dimension_semantics = [#tpu.dimension_semantics<parallel>], iteration_bounds = array<i64: 1>, scalar_prefetch = 0 : i64, scratch_operands = 0 : i64, tpu.core_type = #tpu.core_type<tc>, window_params = [{transform_indices = @transform_0, window_bounds = array<i64: 1, 8, 128>}, {pipeline_mode = #tpu.pipeline_mode<synchronous>, transform_indices = @transform_1, window_bounds = array<i64: 128, 128>}, {pipeline_mode = #tpu.pipeline_mode<synchronous>, transform_indices = @transform_2, window_bounds = array<i64: 1, 128>}, {pipeline_mode = #tpu.pipeline_mode<synchronous>, transform_indices = @transform_3, window_bounds = array<i64: 128, 128>}, {pipeline_mode = #tpu.pipeline_mode<synchronous>, transform_indices = @transform_4, window_bounds = array<i64: 1, 128>}, {pipeline_mode = #tpu.pipeline_mode<synchronous>, transform_indices = @transform_5, window_bounds = array<i64: 128, 128>}, {pipeline_mode = #tpu.pipeline_mode<synchronous>, transform_indices = @transform_6, window_bounds = array<i64: 1, 128>}, {pipeline_mode = #tpu.pipeline_mode<synchronous>, transform_indices = @transform_7, window_bounds = array<i64: 128, 128>}, {pipeline_mode = #tpu.pipeline_mode<synchronous>, transform_indices = @transform_8, window_bounds = array<i64: 1, 128>}, {pipeline_mode = #tpu.pipeline_mode<synchronous>, transform_indices = @transform_9, window_bounds = array<i64: 128, 128>}, {pipeline_mode = #tpu.pipeline_mode<synchronous>, transform_indices = @transform_10, window_bounds = array<i64: 1, 128>}, {transform_indices = @transform_11, window_bounds = array<i64: 1, 8, 128>}]} {
    %c0 = arith.constant 0 : index
    %c0_0 = arith.constant 0 : index
    %c0_1 = arith.constant 0 : index
    %0 = vector.load %arg1[%c0, %c0_0, %c0_1] : memref<1x8x128xf32, #tpu.memory_space<vmem>>, vector<1x8x128xf32>
    %1 = vector.shape_cast %0 : vector<1x8x128xf32> to vector<8x128xf32>
    %c0_2 = arith.constant 0 : index
    %c0_3 = arith.constant 0 : index
    %2 = vector.load %arg2[%c0_2, %c0_3] : memref<128x128xf32, #tpu.memory_space<vmem>>, vector<128x128xf32>
    %cst = arith.constant dense<0.000000e+00> : vector<8x128xf32>
    %3 = tpu.matmul %1, %2, %cst {dimension_numbers = #tpu.dot_dimension_numbers<[1], [0], [0], [1], [0, 0, 1, 1], [], []>} : vector<8x128xf32>, vector<128x128xf32>, vector<8x128xf32> -> vector<8x128xf32>
    %c0_4 = arith.constant 0 : index
    %c0_5 = arith.constant 0 : index
    %4 = vector.load %arg3[%c0_4, %c0_5] : memref<1x128xf32, #tpu.memory_space<vmem>>, vector<1x128xf32>
    %5 = vector.broadcast %4 : vector<1x128xf32> to vector<8x128xf32>
    %6 = arith.addf %3, %5 : vector<8x128xf32>
    %c0_6 = arith.constant 0 : index
    %c0_7 = arith.constant 0 : index
    %7 = vector.load %arg4[%c0_6, %c0_7] : memref<128x128xf32, #tpu.memory_space<vmem>>, vector<128x128xf32>
    %cst_8 = arith.constant dense<0.000000e+00> : vector<8x128xf32>
    %8 = tpu.matmul %1, %7, %cst_8 {dimension_numbers = #tpu.dot_dimension_numbers<[1], [0], [0], [1], [0, 0, 1, 1], [], []>} : vector<8x128xf32>, vector<128x128xf32>, vector<8x128xf32> -> vector<8x128xf32>
    %c0_9 = arith.constant 0 : index
    %c0_10 = arith.constant 0 : index
    %9 = vector.load %arg5[%c0_9, %c0_10] : memref<1x128xf32, #tpu.memory_space<vmem>>, vector<1x128xf32>
    %10 = vector.broadcast %9 : vector<1x128xf32> to vector<8x128xf32>
    %11 = arith.addf %8, %10 : vector<8x128xf32>
    %c0_11 = arith.constant 0 : index
    %c0_12 = arith.constant 0 : index
    %12 = vector.load %arg6[%c0_11, %c0_12] : memref<128x128xf32, #tpu.memory_space<vmem>>, vector<128x128xf32>
    %cst_13 = arith.constant dense<0.000000e+00> : vector<8x128xf32>
    %13 = tpu.matmul %1, %12, %cst_13 {dimension_numbers = #tpu.dot_dimension_numbers<[1], [0], [0], [1], [0, 0, 1, 1], [], []>} : vector<8x128xf32>, vector<128x128xf32>, vector<8x128xf32> -> vector<8x128xf32>
    %c0_14 = arith.constant 0 : index
    %c0_15 = arith.constant 0 : index
    %14 = vector.load %arg7[%c0_14, %c0_15] : memref<1x128xf32, #tpu.memory_space<vmem>>, vector<1x128xf32>
    %15 = vector.broadcast %14 : vector<1x128xf32> to vector<8x128xf32>
    %16 = arith.addf %13, %15 : vector<8x128xf32>
    %17 = tpu.iota {dimensions = array<i32: 0>} : vector<8x128xi32>
    %18 = tpu.iota {dimensions = array<i32: 1>} : vector<1x128xi32>
    %c8_i32 = arith.constant 8 : i32
    %c0_i32 = arith.constant 0 : i32
    %19 = arith.cmpi eq, %c8_i32, %c0_i32 : i32
    %c1_i32 = arith.constant 1 : i32
    %20 = arith.select %19, %c1_i32, %c8_i32 : i32
    %21 = vector.broadcast %20 : i32 to vector<1x128xi32>
    %22 = arith.remsi %18, %21 : vector<1x128xi32>
    %c0_i32_16 = arith.constant 0 : i32
    %23 = vector.broadcast %c0_i32_16 : i32 to vector<1x128xi32>
    %24 = arith.cmpi ne, %22, %23 : vector<1x128xi32>
    %c0_i32_17 = arith.constant 0 : i32
    %25 = vector.broadcast %c0_i32_17 : i32 to vector<1x128xi32>
    %26 = arith.cmpi slt, %22, %25 : vector<1x128xi32>
    %c0_i32_18 = arith.constant 0 : i32
    %27 = arith.cmpi slt, %20, %c0_i32_18 : i32
    %28 = vector.broadcast %27 : i1 to vector<1x128xi1>
    %29 = vector.broadcast %28 : vector<1x128xi1> to vector<1x128xi1>
    %30 = arith.xori %26, %29 : vector<1x128xi1>
    %31 = arith.andi %30, %24 : vector<1x128xi1>
    %32 = vector.broadcast %20 : i32 to vector<1x128xi32>
    %33 = arith.addi %22, %32 : vector<1x128xi32>
    %34 = arith.select %31, %33, %22 : vector<1x128xi1>, vector<1x128xi32>
    %35 = tpu.iota {dimensions = array<i32: 0>} : vector<8x8xi32>
    %36 = tpu.iota {dimensions = array<i32: 1>} : vector<8x8xi32>
    %cst_19 = arith.constant 0.000000e+00 : f32
    %37 = vector.broadcast %cst_19 : f32 to vector<8x128xf32>
    %c0_i32_20 = arith.constant 0 : i32
    %38 = tpu.dynamic_rotate %11 by %c0_i32_20 dim 0 : vector<8x128xf32>, i32 -> vector<8x128xf32>
    %c0_i32_21 = arith.constant 0 : i32
    %39 = vector.broadcast %c0_i32_21 : i32 to vector<8x8xi32>
    %40 = arith.cmpi eq, %35, %39 : vector<8x8xi32>
    %41 = arith.extui %40 : vector<8x8xi1> to vector<8x8xi32>
    %42 = arith.sitofp %41 : vector<8x8xi32> to vector<8x8xf32>
    %43 = arith.mulf %6, %38 : vector<8x128xf32>
    %cst_22 = arith.constant dense<0.000000e+00> : vector<8x128xf32>
    %44 = tpu.matmul %42, %43, %cst_22 {dimension_numbers = #tpu.dot_dimension_numbers<[1], [0], [0], [1], [0, 0, 1, 1], [], []>} : vector<8x8xf32>, vector<8x128xf32>, vector<8x128xf32> -> vector<8x128xf32>
    %45 = arith.addf %37, %44 : vector<8x128xf32>
    %c1_i32_23 = arith.constant 1 : i32
    %46 = tpu.dynamic_rotate %11 by %c1_i32_23 dim 0 : vector<8x128xf32>, i32 -> vector<8x128xf32>
    %c1_i32_24 = arith.constant 1 : i32
    %47 = vector.broadcast %c1_i32_24 : i32 to vector<8x8xi32>
    %48 = arith.cmpi eq, %35, %47 : vector<8x8xi32>
    %49 = arith.extui %48 : vector<8x8xi1> to vector<8x8xi32>
    %50 = arith.sitofp %49 : vector<8x8xi32> to vector<8x8xf32>
    %51 = arith.mulf %6, %46 : vector<8x128xf32>
    %cst_25 = arith.constant dense<0.000000e+00> : vector<8x128xf32>
    %52 = tpu.matmul %50, %51, %cst_25 {dimension_numbers = #tpu.dot_dimension_numbers<[1], [0], [0], [1], [0, 0, 1, 1], [], []>} : vector<8x8xf32>, vector<8x128xf32>, vector<8x128xf32> -> vector<8x128xf32>
    %53 = arith.addf %45, %52 : vector<8x128xf32>
    %c2_i32 = arith.constant 2 : i32
    %54 = tpu.dynamic_rotate %11 by %c2_i32 dim 0 : vector<8x128xf32>, i32 -> vector<8x128xf32>
    %c2_i32_26 = arith.constant 2 : i32
    %55 = vector.broadcast %c2_i32_26 : i32 to vector<8x8xi32>
    %56 = arith.cmpi eq, %35, %55 : vector<8x8xi32>
    %57 = arith.extui %56 : vector<8x8xi1> to vector<8x8xi32>
    %58 = arith.sitofp %57 : vector<8x8xi32> to vector<8x8xf32>
    %59 = arith.mulf %6, %54 : vector<8x128xf32>
    %cst_27 = arith.constant dense<0.000000e+00> : vector<8x128xf32>
    %60 = tpu.matmul %58, %59, %cst_27 {dimension_numbers = #tpu.dot_dimension_numbers<[1], [0], [0], [1], [0, 0, 1, 1], [], []>} : vector<8x8xf32>, vector<8x128xf32>, vector<8x128xf32> -> vector<8x128xf32>
    %61 = arith.addf %53, %60 : vector<8x128xf32>
    %c3_i32 = arith.constant 3 : i32
    %62 = tpu.dynamic_rotate %11 by %c3_i32 dim 0 : vector<8x128xf32>, i32 -> vector<8x128xf32>
    %c3_i32_28 = arith.constant 3 : i32
    %63 = vector.broadcast %c3_i32_28 : i32 to vector<8x8xi32>
    %64 = arith.cmpi eq, %35, %63 : vector<8x8xi32>
    %65 = arith.extui %64 : vector<8x8xi1> to vector<8x8xi32>
    %66 = arith.sitofp %65 : vector<8x8xi32> to vector<8x8xf32>
    %67 = arith.mulf %6, %62 : vector<8x128xf32>
    %cst_29 = arith.constant dense<0.000000e+00> : vector<8x128xf32>
    %68 = tpu.matmul %66, %67, %cst_29 {dimension_numbers = #tpu.dot_dimension_numbers<[1], [0], [0], [1], [0, 0, 1, 1], [], []>} : vector<8x8xf32>, vector<8x128xf32>, vector<8x128xf32> -> vector<8x128xf32>
    %69 = arith.addf %61, %68 : vector<8x128xf32>
    %c4_i32 = arith.constant 4 : i32
    %70 = tpu.dynamic_rotate %11 by %c4_i32 dim 0 : vector<8x128xf32>, i32 -> vector<8x128xf32>
    %c4_i32_30 = arith.constant 4 : i32
    %71 = vector.broadcast %c4_i32_30 : i32 to vector<8x8xi32>
    %72 = arith.cmpi eq, %35, %71 : vector<8x8xi32>
    %73 = arith.extui %72 : vector<8x8xi1> to vector<8x8xi32>
    %74 = arith.sitofp %73 : vector<8x8xi32> to vector<8x8xf32>
    %75 = arith.mulf %6, %70 : vector<8x128xf32>
    %cst_31 = arith.constant dense<0.000000e+00> : vector<8x128xf32>
    %76 = tpu.matmul %74, %75, %cst_31 {dimension_numbers = #tpu.dot_dimension_numbers<[1], [0], [0], [1], [0, 0, 1, 1], [], []>} : vector<8x8xf32>, vector<8x128xf32>, vector<8x128xf32> -> vector<8x128xf32>
    %77 = arith.addf %69, %76 : vector<8x128xf32>
    %c5_i32 = arith.constant 5 : i32
    %78 = tpu.dynamic_rotate %11 by %c5_i32 dim 0 : vector<8x128xf32>, i32 -> vector<8x128xf32>
    %c5_i32_32 = arith.constant 5 : i32
    %79 = vector.broadcast %c5_i32_32 : i32 to vector<8x8xi32>
    %80 = arith.cmpi eq, %35, %79 : vector<8x8xi32>
    %81 = arith.extui %80 : vector<8x8xi1> to vector<8x8xi32>
    %82 = arith.sitofp %81 : vector<8x8xi32> to vector<8x8xf32>
    %83 = arith.mulf %6, %78 : vector<8x128xf32>
    %cst_33 = arith.constant dense<0.000000e+00> : vector<8x128xf32>
    %84 = tpu.matmul %82, %83, %cst_33 {dimension_numbers = #tpu.dot_dimension_numbers<[1], [0], [0], [1], [0, 0, 1, 1], [], []>} : vector<8x8xf32>, vector<8x128xf32>, vector<8x128xf32> -> vector<8x128xf32>
    %85 = arith.addf %77, %84 : vector<8x128xf32>
    %c6_i32 = arith.constant 6 : i32
    %86 = tpu.dynamic_rotate %11 by %c6_i32 dim 0 : vector<8x128xf32>, i32 -> vector<8x128xf32>
    %c6_i32_34 = arith.constant 6 : i32
    %87 = vector.broadcast %c6_i32_34 : i32 to vector<8x8xi32>
    %88 = arith.cmpi eq, %35, %87 : vector<8x8xi32>
    %89 = arith.extui %88 : vector<8x8xi1> to vector<8x8xi32>
    %90 = arith.sitofp %89 : vector<8x8xi32> to vector<8x8xf32>
    %91 = arith.mulf %6, %86 : vector<8x128xf32>
    %cst_35 = arith.constant dense<0.000000e+00> : vector<8x128xf32>
    %92 = tpu.matmul %90, %91, %cst_35 {dimension_numbers = #tpu.dot_dimension_numbers<[1], [0], [0], [1], [0, 0, 1, 1], [], []>} : vector<8x8xf32>, vector<8x128xf32>, vector<8x128xf32> -> vector<8x128xf32>
    %93 = arith.addf %85, %92 : vector<8x128xf32>
    %c7_i32 = arith.constant 7 : i32
    %94 = tpu.dynamic_rotate %11 by %c7_i32 dim 0 : vector<8x128xf32>, i32 -> vector<8x128xf32>
    %c7_i32_36 = arith.constant 7 : i32
    %95 = vector.broadcast %c7_i32_36 : i32 to vector<8x8xi32>
    %96 = arith.cmpi eq, %35, %95 : vector<8x8xi32>
    %97 = arith.extui %96 : vector<8x8xi1> to vector<8x8xi32>
    %98 = arith.sitofp %97 : vector<8x8xi32> to vector<8x8xf32>
    %99 = arith.mulf %6, %94 : vector<8x128xf32>
    %cst_37 = arith.constant dense<0.000000e+00> : vector<8x128xf32>
    %100 = tpu.matmul %98, %99, %cst_37 {dimension_numbers = #tpu.dot_dimension_numbers<[1], [0], [0], [1], [0, 0, 1, 1], [], []>} : vector<8x8xf32>, vector<8x128xf32>, vector<8x128xf32> -> vector<8x128xf32>
    %101 = arith.addf %93, %100 : vector<8x128xf32>
    %cst_38 = arith.constant dense<0xFF800000> : vector<128xf32>
    %102 = vector.multi_reduction <maximumf>, %101, %cst_38 [0] : vector<8x128xf32> to vector<128xf32>
    %103 = vector.shape_cast %102 : vector<128xf32> to vector<1x128xf32>
    %104 = vector.broadcast %103 : vector<1x128xf32> to vector<8x128xf32>
    %105 = arith.cmpf oeq, %101, %104 : vector<8x128xf32>
    %c8_i32_39 = arith.constant 8 : i32
    %106 = vector.broadcast %c8_i32_39 : i32 to vector<8x128xi32>
    %107 = arith.select %105, %17, %106 : vector<8x128xi1>, vector<8x128xi32>
    %cst_40 = arith.constant dense<2147483647> : vector<128xi32>
    %108 = vector.multi_reduction <minsi>, %107, %cst_40 [0] : vector<8x128xi32> to vector<128xi32>
    %109 = vector.shape_cast %108 : vector<128xi32> to vector<1x128xi32>
    %110 = vector.broadcast %109 : vector<1x128xi32> to vector<8x128xi32>
    %111 = arith.cmpi eq, %17, %110 : vector<8x128xi32>
    %cst_41 = arith.constant 0xFF800000 : f32
    %112 = vector.broadcast %cst_41 : f32 to vector<8x128xf32>
    %113 = arith.select %111, %112, %101 : vector<8x128xi1>, vector<8x128xf32>
    %cst_42 = arith.constant dense<0xFF800000> : vector<128xf32>
    %114 = vector.multi_reduction <maximumf>, %113, %cst_42 [0] : vector<8x128xf32> to vector<128xf32>
    %115 = vector.shape_cast %114 : vector<128xf32> to vector<1x128xf32>
    %116 = vector.broadcast %115 : vector<1x128xf32> to vector<8x128xf32>
    %117 = arith.cmpf oeq, %113, %116 : vector<8x128xf32>
    %c8_i32_43 = arith.constant 8 : i32
    %118 = vector.broadcast %c8_i32_43 : i32 to vector<8x128xi32>
    %119 = arith.select %117, %17, %118 : vector<8x128xi1>, vector<8x128xi32>
    %cst_44 = arith.constant dense<2147483647> : vector<128xi32>
    %120 = vector.multi_reduction <minsi>, %119, %cst_44 [0] : vector<8x128xi32> to vector<128xi32>
    %121 = vector.shape_cast %120 : vector<128xi32> to vector<1x128xi32>
    %122 = vector.broadcast %121 : vector<1x128xi32> to vector<8x128xi32>
    %123 = arith.cmpi eq, %17, %122 : vector<8x128xi32>
    %cst_45 = arith.constant 0xFF800000 : f32
    %124 = vector.broadcast %cst_45 : f32 to vector<8x128xf32>
    %125 = arith.select %123, %124, %113 : vector<8x128xi1>, vector<8x128xf32>
    %cst_46 = arith.constant dense<0xFF800000> : vector<128xf32>
    %126 = vector.multi_reduction <maximumf>, %125, %cst_46 [0] : vector<8x128xf32> to vector<128xf32>
    %127 = vector.shape_cast %126 : vector<128xf32> to vector<1x128xf32>
    %128 = vector.broadcast %127 : vector<1x128xf32> to vector<8x128xf32>
    %129 = arith.cmpf oeq, %125, %128 : vector<8x128xf32>
    %c8_i32_47 = arith.constant 8 : i32
    %130 = vector.broadcast %c8_i32_47 : i32 to vector<8x128xi32>
    %131 = arith.select %129, %17, %130 : vector<8x128xi1>, vector<8x128xi32>
    %cst_48 = arith.constant dense<2147483647> : vector<128xi32>
    %132 = vector.multi_reduction <minsi>, %131, %cst_48 [0] : vector<8x128xi32> to vector<128xi32>
    %133 = vector.shape_cast %132 : vector<128xi32> to vector<1x128xi32>
    %134 = vector.broadcast %133 : vector<1x128xi32> to vector<8x128xi32>
    %135 = arith.cmpi eq, %17, %134 : vector<8x128xi32>
    %cst_49 = arith.constant 0xFF800000 : f32
    %136 = vector.broadcast %cst_49 : f32 to vector<8x128xf32>
    %137 = arith.select %135, %136, %125 : vector<8x128xi1>, vector<8x128xf32>
    %cst_50 = arith.constant dense<0xFF800000> : vector<128xf32>
    %138 = vector.multi_reduction <maximumf>, %137, %cst_50 [0] : vector<8x128xf32> to vector<128xf32>
    %139 = vector.shape_cast %138 : vector<128xf32> to vector<1x128xf32>
    %140 = vector.broadcast %139 : vector<1x128xf32> to vector<8x128xf32>
    %141 = arith.cmpf oeq, %137, %140 : vector<8x128xf32>
    %c8_i32_51 = arith.constant 8 : i32
    %142 = vector.broadcast %c8_i32_51 : i32 to vector<8x128xi32>
    %143 = arith.select %141, %17, %142 : vector<8x128xi1>, vector<8x128xi32>
    %cst_52 = arith.constant dense<2147483647> : vector<128xi32>
    %144 = vector.multi_reduction <minsi>, %143, %cst_52 [0] : vector<8x128xi32> to vector<128xi32>
    %145 = vector.shape_cast %144 : vector<128xi32> to vector<1x128xi32>
    %146 = arith.subf %103, %103 : vector<1x128xf32>
    %147 = math.exp %146 : vector<1x128xf32>
    %148 = arith.subf %115, %103 : vector<1x128xf32>
    %149 = math.exp %148 : vector<1x128xf32>
    %150 = arith.subf %127, %103 : vector<1x128xf32>
    %151 = math.exp %150 : vector<1x128xf32>
    %152 = arith.subf %139, %103 : vector<1x128xf32>
    %153 = math.exp %152 : vector<1x128xf32>
    %154 = arith.addf %147, %149 : vector<1x128xf32>
    %155 = arith.addf %154, %151 : vector<1x128xf32>
    %156 = arith.addf %155, %153 : vector<1x128xf32>
    %157 = tpu.reciprocal %156 : vector<1x128xf32> -> vector<1x128xf32>
    %cst_53 = arith.constant 0.000000e+00 : f32
    %158 = vector.broadcast %cst_53 : f32 to vector<8x128xf32>
    %159 = arith.addi %109, %34 : vector<1x128xi32>
    %c7_i32_54 = arith.constant 7 : i32
    %160 = vector.broadcast %c7_i32_54 : i32 to vector<1x128xi32>
    %161 = arith.minsi %159, %160 : vector<1x128xi32>
    %162 = vector.broadcast %161 : vector<1x128xi32> to vector<8x128xi32>
    %163 = arith.cmpi eq, %17, %162 : vector<8x128xi32>
    %164 = arith.mulf %147, %157 : vector<1x128xf32>
    %cst_55 = arith.constant 0.000000e+00 : f32
    %165 = vector.shape_cast %164 : vector<1x128xf32> to vector<1x128xf32>
    %166 = vector.broadcast %165 : vector<1x128xf32> to vector<8x128xf32>
    %167 = vector.broadcast %cst_55 : f32 to vector<8x128xf32>
    %168 = arith.select %163, %166, %167 : vector<8x128xi1>, vector<8x128xf32>
    %169 = arith.addf %158, %168 : vector<8x128xf32>
    %170 = arith.addi %121, %34 : vector<1x128xi32>
    %c7_i32_56 = arith.constant 7 : i32
    %171 = vector.broadcast %c7_i32_56 : i32 to vector<1x128xi32>
    %172 = arith.minsi %170, %171 : vector<1x128xi32>
    %173 = vector.broadcast %172 : vector<1x128xi32> to vector<8x128xi32>
    %174 = arith.cmpi eq, %17, %173 : vector<8x128xi32>
    %175 = arith.mulf %149, %157 : vector<1x128xf32>
    %cst_57 = arith.constant 0.000000e+00 : f32
    %176 = vector.shape_cast %175 : vector<1x128xf32> to vector<1x128xf32>
    %177 = vector.broadcast %176 : vector<1x128xf32> to vector<8x128xf32>
    %178 = vector.broadcast %cst_57 : f32 to vector<8x128xf32>
    %179 = arith.select %174, %177, %178 : vector<8x128xi1>, vector<8x128xf32>
    %180 = arith.addf %169, %179 : vector<8x128xf32>
    %181 = arith.addi %133, %34 : vector<1x128xi32>
    %c7_i32_58 = arith.constant 7 : i32
    %182 = vector.broadcast %c7_i32_58 : i32 to vector<1x128xi32>
    %183 = arith.minsi %181, %182 : vector<1x128xi32>
    %184 = vector.broadcast %183 : vector<1x128xi32> to vector<8x128xi32>
    %185 = arith.cmpi eq, %17, %184 : vector<8x128xi32>
    %186 = arith.mulf %151, %157 : vector<1x128xf32>
    %cst_59 = arith.constant 0.000000e+00 : f32
    %187 = vector.shape_cast %186 : vector<1x128xf32> to vector<1x128xf32>
    %188 = vector.broadcast %187 : vector<1x128xf32> to vector<8x128xf32>
    %189 = vector.broadcast %cst_59 : f32 to vector<8x128xf32>
    %190 = arith.select %185, %188, %189 : vector<8x128xi1>, vector<8x128xf32>
    %191 = arith.addf %180, %190 : vector<8x128xf32>
    %192 = arith.addi %145, %34 : vector<1x128xi32>
    %c7_i32_60 = arith.constant 7 : i32
    %193 = vector.broadcast %c7_i32_60 : i32 to vector<1x128xi32>
    %194 = arith.minsi %192, %193 : vector<1x128xi32>
    %195 = vector.broadcast %194 : vector<1x128xi32> to vector<8x128xi32>
    %196 = arith.cmpi eq, %17, %195 : vector<8x128xi32>
    %197 = arith.mulf %153, %157 : vector<1x128xf32>
    %cst_61 = arith.constant 0.000000e+00 : f32
    %198 = vector.shape_cast %197 : vector<1x128xf32> to vector<1x128xf32>
    %199 = vector.broadcast %198 : vector<1x128xf32> to vector<8x128xf32>
    %200 = vector.broadcast %cst_61 : f32 to vector<8x128xf32>
    %201 = arith.select %196, %199, %200 : vector<8x128xi1>, vector<8x128xf32>
    %202 = arith.addf %191, %201 : vector<8x128xf32>
    %cst_62 = arith.constant 1.000000e+00 : f32
    %203 = vector.broadcast %cst_62 : f32 to vector<8x8xf32>
    %204 = arith.mulf %16, %202 : vector<8x128xf32>
    %cst_63 = arith.constant dense<0.000000e+00> : vector<8x128xf32>
    %205 = tpu.matmul %203, %204, %cst_63 {dimension_numbers = #tpu.dot_dimension_numbers<[1], [0], [0], [1], [0, 0, 1, 1], [], []>} : vector<8x8xf32>, vector<8x128xf32>, vector<8x128xf32> -> vector<8x128xf32>
    %206 = arith.subi %36, %35 : vector<8x8xi32>
    %207 = math.absi %206 : vector<8x8xi32>
    %c1_i32_64 = arith.constant 1 : i32
    %208 = vector.broadcast %c1_i32_64 : i32 to vector<8x8xi32>
    %209 = arith.cmpi sle, %207, %208 : vector<8x8xi32>
    %cst_65 = arith.constant 0.333333343 : f32
    %cst_66 = arith.constant 0.000000e+00 : f32
    %210 = vector.broadcast %cst_65 : f32 to vector<8x8xf32>
    %211 = vector.broadcast %cst_66 : f32 to vector<8x8xf32>
    %212 = arith.select %209, %210, %211 : vector<8x8xi1>, vector<8x8xf32>
    %213 = arith.addf %205, %1 : vector<8x128xf32>
    %cst_67 = arith.constant dense<0.000000e+00> : vector<8x128xf32>
    %214 = tpu.matmul %212, %213, %cst_67 {dimension_numbers = #tpu.dot_dimension_numbers<[1], [0], [0], [1], [0, 0, 1, 1], [], []>} : vector<8x8xf32>, vector<8x128xf32>, vector<8x128xf32> -> vector<8x128xf32>
    %215 = arith.subf %213, %214 : vector<8x128xf32>
    %c0_68 = arith.constant 0 : index
    %c0_69 = arith.constant 0 : index
    %216 = vector.load %arg8[%c0_68, %c0_69] : memref<128x128xf32, #tpu.memory_space<vmem>>, vector<128x128xf32>
    %cst_70 = arith.constant dense<0.000000e+00> : vector<8x128xf32>
    %217 = tpu.matmul %215, %216, %cst_70 {dimension_numbers = #tpu.dot_dimension_numbers<[1], [0], [0], [1], [0, 0, 1, 1], [], []>} : vector<8x128xf32>, vector<128x128xf32>, vector<8x128xf32> -> vector<8x128xf32>
    %c0_71 = arith.constant 0 : index
    %c0_72 = arith.constant 0 : index
    %218 = vector.load %arg9[%c0_71, %c0_72] : memref<1x128xf32, #tpu.memory_space<vmem>>, vector<1x128xf32>
    %219 = vector.broadcast %218 : vector<1x128xf32> to vector<8x128xf32>
    %220 = arith.addf %217, %219 : vector<8x128xf32>
    %cst_73 = arith.constant 0.000000e+00 : f32
    %221 = vector.broadcast %cst_73 : f32 to vector<8x128xf32>
    %222 = arith.maximumf %220, %221 : vector<8x128xf32>
    %c0_74 = arith.constant 0 : index
    %c0_75 = arith.constant 0 : index
    %223 = vector.load %arg10[%c0_74, %c0_75] : memref<128x128xf32, #tpu.memory_space<vmem>>, vector<128x128xf32>
    %cst_76 = arith.constant dense<0.000000e+00> : vector<8x128xf32>
    %224 = tpu.matmul %222, %223, %cst_76 {dimension_numbers = #tpu.dot_dimension_numbers<[1], [0], [0], [1], [0, 0, 1, 1], [], []>} : vector<8x128xf32>, vector<128x128xf32>, vector<8x128xf32> -> vector<8x128xf32>
    %c0_77 = arith.constant 0 : index
    %c0_78 = arith.constant 0 : index
    %225 = vector.load %arg11[%c0_77, %c0_78] : memref<1x128xf32, #tpu.memory_space<vmem>>, vector<1x128xf32>
    %226 = vector.broadcast %225 : vector<1x128xf32> to vector<8x128xf32>
    %227 = arith.addf %224, %226 : vector<8x128xf32>
    %228 = arith.addf %227, %215 : vector<8x128xf32>
    %cst_79 = arith.constant dense<0.000000e+00> : vector<8x128xf32>
    %229 = tpu.matmul %212, %228, %cst_79 {dimension_numbers = #tpu.dot_dimension_numbers<[1], [0], [0], [1], [0, 0, 1, 1], [], []>} : vector<8x8xf32>, vector<8x128xf32>, vector<8x128xf32> -> vector<8x128xf32>
    %230 = arith.subf %228, %229 : vector<8x128xf32>
    %c0_80 = arith.constant 0 : index
    %c0_81 = arith.constant 0 : index
    %c0_82 = arith.constant 0 : index
    %231 = vector.load %arg12[%c0_80, %c0_81, %c0_82] : memref<1x8x128xf32, #tpu.memory_space<vmem>>, vector<1x8x128xf32>
    %232 = vector.shape_cast %231 : vector<1x8x128xf32> to vector<8x128xf32>
    %233 = vector.shape_cast %230 : vector<8x128xf32> to vector<1x8x128xf32>
    tpu.vector_store %arg12[%c0_80, %c0_81, %c0_82], %233 {strides = array<i32>} : memref<1x8x128xf32, #tpu.memory_space<vmem>>, vector<1x8x128xf32>,
    return
  }
  func.func @transform_0(%arg0: i32) -> (i32, i32, i32) {
    %c0_i32 = arith.constant 0 : i32
    %c0_i32_0 = arith.constant 0 : i32
    %c0_i32_1 = arith.constant 0 : i32
    return %arg0, %c0_i32, %c0_i32_0 : i32, i32, i32
  }
  func.func @transform_1(%arg0: i32) -> (i32, i32) {
    %c0_i32 = arith.constant 0 : i32
    %c0_i32_0 = arith.constant 0 : i32
    %c0_i32_1 = arith.constant 0 : i32
    return %c0_i32, %c0_i32_0 : i32, i32
  }
  func.func @transform_2(%arg0: i32) -> (i32, i32) {
    %c0_i32 = arith.constant 0 : i32
    %c0_i32_0 = arith.constant 0 : i32
    %c0_i32_1 = arith.constant 0 : i32
    return %c0_i32, %c0_i32_0 : i32, i32
  }
  func.func @transform_3(%arg0: i32) -> (i32, i32) {
    %c0_i32 = arith.constant 0 : i32
    %c0_i32_0 = arith.constant 0 : i32
    %c0_i32_1 = arith.constant 0 : i32
    return %c0_i32, %c0_i32_0 : i32, i32
  }
  func.func @transform_4(%arg0: i32) -> (i32, i32) {
    %c0_i32 = arith.constant 0 : i32
    %c0_i32_0 = arith.constant 0 : i32
    %c0_i32_1 = arith.constant 0 : i32
    return %c0_i32, %c0_i32_0 : i32, i32
  }
  func.func @transform_5(%arg0: i32) -> (i32, i32) {
    %c0_i32 = arith.constant 0 : i32
    %c0_i32_0 = arith.constant 0 : i32
    %c0_i32_1 = arith.constant 0 : i32
    return %c0_i32, %c0_i32_0 : i32, i32
  }
  func.func @transform_6(%arg0: i32) -> (i32, i32) {
    %c0_i32 = arith.constant 0 : i32
    %c0_i32_0 = arith.constant 0 : i32
    %c0_i32_1 = arith.constant 0 : i32
    return %c0_i32, %c0_i32_0 : i32, i32
  }
  func.func @transform_7(%arg0: i32) -> (i32, i32) {
    %c0_i32 = arith.constant 0 : i32
    %c0_i32_0 = arith.constant 0 : i32
    %c0_i32_1 = arith.constant 0 : i32
    return %c0_i32, %c0_i32_0 : i32, i32
  }
  func.func @transform_8(%arg0: i32) -> (i32, i32) {
    %c0_i32 = arith.constant 0 : i32
    %c0_i32_0 = arith.constant 0 : i32
    %c0_i32_1 = arith.constant 0 : i32
    return %c0_i32, %c0_i32_0 : i32, i32
  }
  func.func @transform_9(%arg0: i32) -> (i32, i32) {
    %c0_i32 = arith.constant 0 : i32
    %c0_i32_0 = arith.constant 0 : i32
    %c0_i32_1 = arith.constant 0 : i32
    return %c0_i32, %c0_i32_0 : i32, i32
  }
  func.func @transform_10(%arg0: i32) -> (i32, i32) {
    %c0_i32 = arith.constant 0 : i32
    %c0_i32_0 = arith.constant 0 : i32
    %c0_i32_1 = arith.constant 0 : i32
    return %c0_i32, %c0_i32_0 : i32, i32
  }
  func.func @transform_11(%arg0: i32) -> (i32, i32, i32) {
    %c0_i32 = arith.constant 0 : i32
    %c0_i32_0 = arith.constant 0 : i32
    %c0_i32_1 = arith.constant 0 : i32
    return %arg0, %c0_i32, %c0_i32_0 : i32, i32, i32
  }
}

</mosaic_0001>

<llo_original>
// kernel: tpu_custom_call.1
$region0: #{tpu_custom_call.1}
  #allocation0 [shape = 'u32[]', space=smem, size = 0x4, offset = 0x4, fixed_abs, tag = 'smem constant byte address 0x4 - core index']
  #allocation1 [shape = 'u32[144,128]{1,0:T(1,128)}', space=vmem, size = 0x12000, scoped, tag = 'internal scratch']
  %s0 = inlined_call_operand.hbm [shape: f32[1,8,128], index: 0, kind: input, shape index: {}]
  %s1 = inlined_call_operand.hbm [shape: f32[128,128], index: 1, kind: input, shape index: {}]
  %s2 = inlined_call_operand.vmem [shape: f32[1,128], index: 2, kind: input, shape index: {}]
  %s3 = inlined_call_operand.hbm [shape: f32[128,128], index: 3, kind: input, shape index: {}]
  %s4 = inlined_call_operand.vmem [shape: f32[1,128], index: 4, kind: input, shape index: {}]
  %s5 = inlined_call_operand.hbm [shape: f32[128,128], index: 5, kind: input, shape index: {}]
  %s6 = inlined_call_operand.vmem [shape: f32[1,128], index: 6, kind: input, shape index: {}]
  %s7 = inlined_call_operand.hbm [shape: f32[128,128], index: 7, kind: input, shape index: {}]
  %s8 = inlined_call_operand.vmem [shape: f32[1,128], index: 8, kind: input, shape index: {}]
  %s9 = inlined_call_operand.hbm [shape: f32[128,128], index: 9, kind: input, shape index: {}]
  %s10 = inlined_call_operand.vmem [shape: f32[1,128], index: 10, kind: input, shape index: {}]
  %s11 = inlined_call_operand.hbm [shape: f32[1,8,128], index: 11, kind: output, shape index: {}]
  %s12 = sld [smem:[#allocation0]]
  $region78: #{tpu_custom_call.1} parent=0
    _
  %s14 = ssub.s32 1, %s12
  %s15 = scalar_select 0, %s14, %s12
  $region1: #{tpu_custom_call.1} parent=0
    #allocation2 [shape = 'u8[4096]{0}', space=vmem, size = 0x1000, scoped, tag = 'input window, operand 0, single buffered']
    #allocation3 [shape = 's32[1]{0}', space=sflag, size = 0x4, scoped, tag = 'scoped memory for tpu_custom_call.1']
    #allocation4 [shape = 's32[1]{0}', space=sflag, size = 0x4, scoped, tag = 'scoped memory for tpu_custom_call.1']
    #allocation5 [shape = 'u8[65536]{0}', space=vmem, size = 0x10000, scoped, tag = 'input window, operand 1, single buffered']
    #allocation6 [shape = 's32[1]{0}', space=sflag, size = 0x4, scoped, tag = 'scoped memory for tpu_custom_call.1']
    #allocation7 [shape = 'u8[65536]{0}', space=vmem, size = 0x10000, scoped, tag = 'input window, operand 3, single buffered']
    #allocation8 [shape = 'u8[65536]{0}', space=vmem, size = 0x10000, scoped, tag = 'input window, operand 5, single buffered']
    #allocation9 [shape = 's32[1]{0}', space=sflag, size = 0x4, scoped, tag = 'scoped memory for tpu_custom_call.1']
    #allocation10 [shape = 'u8[65536]{0}', space=vmem, size = 0x10000, scoped, tag = 'input window, operand 7, single buffered']
    #allocation11 [shape = 'u8[65536]{0}', space=vmem, size = 0x10000, scoped, tag = 'input window, operand 9, single buffered']
    #allocation12 [shape = 's32[1]{0}', space=sflag, size = 0x4, scoped, tag = 'scoped memory for tpu_custom_call.1']
    #allocation13 [shape = 'u8[4096]{0}', space=vmem, size = 0x1000, scoped, tag = 'output window, operand 0, single buffered']
    %16 = vsyncpa [#allocation3], 0
    %17 = vsyncpa [#allocation6], 0
    %18 = vsyncpa [#allocation9], 0
    %19 = vsyncpa [#allocation12], 0
    %20 = vsyncpa [#allocation4], 0
    // Predicated region
    $region2: #{tpu_custom_call.1} parent=1 // pred_check
      _
    $region3: #{tpu_custom_call.1} parent=1 // pred_check_branch
      %22 = sbr.rel (0) target = $region5
    $region4: #{tpu_custom_call.1} parent=1 // pred_region
      %s24 = ssub.s32 128, 128
      %25 = vsyncadd [#allocation3], %s24
      %s27 = sshll.u32 [#allocation2], 4
      %s28 = int_to_ptr.vmem [resolvable:$true] %s27
      %30 = dma.hbm_to_vmem [thread:$0]  %s0, 128, %s28, [#allocation3]
    $region5: #{tpu_custom_call.1} parent=1 // pred_fallthru
      _
    // Predicated region
    $region6: #{tpu_custom_call.1} parent=1 // pred_check
      _
    $region7: #{tpu_custom_call.1} parent=1 // pred_check_branch
      %32 = sbr.rel (0) target = $region9
    $region8: #{tpu_custom_call.1} parent=1 // pred_region
      %s34 = ssub.s32 2048, 2048
      %35 = vsyncadd [#allocation6], %s34
      %s36 = sshll.u32 [#allocation5], 4
      %s37 = int_to_ptr.vmem [resolvable:$true] %s36
      %42 = dma.hbm_to_vmem [thread:$0]  %s1, 2048, %s37, [#allocation6], 128, 128, 8
    $region9: #{tpu_custom_call.1} parent=1 // pred_fallthru
      _
    // Predicated region
    $region10: #{tpu_custom_call.1} parent=1 // pred_check
      _
    $region11: #{tpu_custom_call.1} parent=1 // pred_check_branch
      %44 = sbr.rel (0) target = $region13
    $region12: #{tpu_custom_call.1} parent=1 // pred_region
      _
    $region13: #{tpu_custom_call.1} parent=1 // pred_fallthru
      _
    // Predicated region
    $region14: #{tpu_custom_call.1} parent=1 // pred_check
      _
    $region15: #{tpu_custom_call.1} parent=1 // pred_check_branch
      %46 = sbr.rel (0) target = $region17
    $region16: #{tpu_custom_call.1} parent=1 // pred_region
      %s48 = ssub.s32 2048, 2048
      %49 = vsyncadd [#allocation6], %s48
      %s50 = sshll.u32 [#allocation7], 4
      %s51 = int_to_ptr.vmem [resolvable:$true] %s50
      %56 = dma.hbm_to_vmem [thread:$0]  %s3, 2048, %s51, [#allocation6], 128, 128, 8
    $region17: #{tpu_custom_call.1} parent=1 // pred_fallthru
      _
    // Predicated region
    $region18: #{tpu_custom_call.1} parent=1 // pred_check
      _
    $region19: #{tpu_custom_call.1} parent=1 // pred_check_branch
      %58 = sbr.rel (0) target = $region21
    $region20: #{tpu_custom_call.1} parent=1 // pred_region
      _
    $region21: #{tpu_custom_call.1} parent=1 // pred_fallthru
      _
    // Predicated region
    $region22: #{tpu_custom_call.1} parent=1 // pred_check
      _
    $region23: #{tpu_custom_call.1} parent=1 // pred_check_branch
      %60 = sbr.rel (0) target = $region25
    $region24: #{tpu_custom_call.1} parent=1 // pred_region
      %s62 = ssub.s32 2048, 2048
      %63 = vsyncadd [#allocation9], %s62
      %s64 = sshll.u32 [#allocation8], 4
      %s65 = int_to_ptr.vmem [resolvable:$true] %s64
      %70 = dma.hbm_to_vmem [thread:$0]  %s5, 2048, %s65, [#allocation9], 128, 128, 8
    $region25: #{tpu_custom_call.1} parent=1 // pred_fallthru
      _
    // Predicated region
    $region26: #{tpu_custom_call.1} parent=1 // pred_check
      _
    $region27: #{tpu_custom_call.1} parent=1 // pred_check_branch
      %72 = sbr.rel (0) target = $region29
    $region28: #{tpu_custom_call.1} parent=1 // pred_region
      _
    $region29: #{tpu_custom_call.1} parent=1 // pred_fallthru
      _
    // Predicated region
    $region30: #{tpu_custom_call.1} parent=1 // pred_check
      _
    $region31: #{tpu_custom_call.1} parent=1 // pred_check_branch
      %74 = sbr.rel (0) target = $region33
    $region32: #{tpu_custom_call.1} parent=1 // pred_region
      %s76 = ssub.s32 2048, 2048
      %77 = vsyncadd [#allocation9], %s76
      %s78 = sshll.u32 [#allocation10], 4
      %s79 = int_to_ptr.vmem [resolvable:$true] %s78
      %84 = dma.hbm_to_vmem [thread:$0]  %s7, 2048, %s79, [#allocation9], 128, 128, 8
    $region33: #{tpu_custom_call.1} parent=1 // pred_fallthru
      _
    // Predicated region
    $region34: #{tpu_custom_call.1} parent=1 // pred_check
      _
    $region35: #{tpu_custom_call.1} parent=1 // pred_check_branch
      %86 = sbr.rel (0) target = $region37
    $region36: #{tpu_custom_call.1} parent=1 // pred_region
      _
    $region37: #{tpu_custom_call.1} parent=1 // pred_fallthru
      _
    // Predicated region
    $region38: #{tpu_custom_call.1} parent=1 // pred_check
      _
    $region39: #{tpu_custom_call.1} parent=1 // pred_check_branch
      %88 = sbr.rel (0) target = $region41
    $region40: #{tpu_custom_call.1} parent=1 // pred_region
      %s90 = ssub.s32 2048, 2048
      %91 = vsyncadd [#allocation12], %s90
      %s92 = sshll.u32 [#allocation11], 4
      %s93 = int_to_ptr.vmem [resolvable:$true] %s92
      %98 = dma.hbm_to_vmem [thread:$0]  %s9, 2048, %s93, [#allocation12], 128, 128, 8
    $region41: #{tpu_custom_call.1} parent=1 // pred_fallthru
      _
    // Predicated region
    $region42: #{tpu_custom_call.1} parent=1 // pred_check
      _
    $region43: #{tpu_custom_call.1} parent=1 // pred_check_branch
      %100 = sbr.rel (0) target = $region45
    $region44: #{tpu_custom_call.1} parent=1 // pred_region
      _
    $region45: #{tpu_custom_call.1} parent=1 // pred_fallthru
      _
    // Predicated region
    $region46: #{tpu_custom_call.1} parent=1 // pred_check
      _
    $region47: #{tpu_custom_call.1} parent=1 // pred_check_branch
      %102 = sbr.rel (0) target = $region49
    $region48: #{tpu_custom_call.1} parent=1 // pred_region
      %103 = dma.done [#allocation3], 128
    $region49: #{tpu_custom_call.1} parent=1 // pred_fallthru
      _
    // Predicated region
    $region50: #{tpu_custom_call.1} parent=1 // pred_check
      _
    $region51: #{tpu_custom_call.1} parent=1 // pred_check_branch
      %105 = sbr.rel (0) target = $region53
    $region52: #{tpu_custom_call.1} parent=1 // pred_region
      %106 = dma.done [#allocation6], 2048
    $region53: #{tpu_custom_call.1} parent=1 // pred_fallthru
      _
    // Predicated region
    $region54: #{tpu_custom_call.1} parent=1 // pred_check
      _
    $region55: #{tpu_custom_call.1} parent=1 // pred_check_branch
      %108 = sbr.rel (0) target = $region57
    $region56: #{tpu_custom_call.1} parent=1 // pred_region
      %109 = dma.done [#allocation6], 2048
    $region57: #{tpu_custom_call.1} parent=1 // pred_fallthru
      _
    // Predicated region
    $region58: #{tpu_custom_call.1} parent=1 // pred_check
      _
    $region59: #{tpu_custom_call.1} parent=1 // pred_check_branch
      %111 = sbr.rel (0) target = $region61
    $region60: #{tpu_custom_call.1} parent=1 // pred_region
      %112 = dma.done [#allocation9], 2048
    $region61: #{tpu_custom_call.1} parent=1 // pred_fallthru
      _
    // Predicated region
    $region62: #{tpu_custom_call.1} parent=1 // pred_check
      _
    $region63: #{tpu_custom_call.1} parent=1 // pred_check_branch
      %114 = sbr.rel (0) target = $region65
    $region64: #{tpu_custom_call.1} parent=1 // pred_region
      %115 = dma.done [#allocation9], 2048
    $region65: #{tpu_custom_call.1} parent=1 // pred_fallthru
      _
    // Predicated region
    $region66: #{tpu_custom_call.1} parent=1 // pred_check
      _
    $region67: #{tpu_custom_call.1} parent=1 // pred_check_branch
      %117 = sbr.rel (0) target = $region69
    $region68: #{tpu_custom_call.1} parent=1 // pred_region
      %118 = dma.done [#allocation12], 2048
    $region69: #{tpu_custom_call.1} parent=1 // pred_fallthru
      _
    %v119 = vld [vmem:[#allocation2] sm:$0xff]
    %v120 = vld [vmem:[#allocation5] sm:$0xff]
    %v121 = vld [vmem:[#allocation5 + $0x8] sm:$0xff]
    %v122 = vld [vmem:[#allocation5 + $0x10] sm:$0xff]
    %v123 = vld [vmem:[#allocation5 + $0x18] sm:$0xff]
    %v124 = vld [vmem:[#allocation5 + $0x20] sm:$0xff]
    %v125 = vld [vmem:[#allocation5 + $0x28] sm:$0xff]
    %v126 = vld [vmem:[#allocation5 + $0x30] sm:$0xff]
    %v127 = vld [vmem:[#allocation5 + $0x38] sm:$0xff]
    %v128 = vld [vmem:[#allocation5 + $0x40] sm:$0xff]
    %v129 = vld [vmem:[#allocation5 + $0x48] sm:$0xff]
    %v130 = vld [vmem:[#allocation5 + $0x50] sm:$0xff]
    %v131 = vld [vmem:[#allocation5 + $0x58] sm:$0xff]
    %v132 = vld [vmem:[#allocation5 + $0x60] sm:$0xff]
    %v133 = vld [vmem:[#allocation5 + $0x68] sm:$0xff]
    %v134 = vld [vmem:[#allocation5 + $0x70] sm:$0xff]
    %v135 = vld [vmem:[#allocation5 + $0x78] sm:$0xff]
    %v136 = vld [vmem:[%s2] sm:$0x1]
    %v138 = vlaneseq
    %v139 = vshrl.u32 %v138, 7
    %v140 = vsub.s32 0, %v139
    %v141 = vrot.slane %v136, %v140
    %143 = vmatprep.subr.mxu0 0.0
    %144 = vmatpush1.msra.mxu0 %v120
    %145 = vmatprep.subr.mxu0 0.0
    %146 = vmatpush1.msra.mxu0 %v121
    %147 = vmatprep.subr.mxu0 0.0
    %148 = vmatpush1.msra.mxu0 %v122
    %149 = vmatprep.subr.mxu0 0.0
    %150 = vmatpush1.msra.mxu0 %v123
    %151 = vmatprep.subr.mxu0 0.0
    %152 = vmatpush1.msra.mxu0 %v124
    %153 = vmatprep.subr.mxu0 0.0
    %154 = vmatpush1.msra.mxu0 %v125
    %155 = vmatprep.subr.mxu0 0.0
    %156 = vmatpush1.msra.mxu0 %v126
    %157 = vmatprep.subr.mxu0 0.0
    %158 = vmatpush1.msra.mxu0 %v127
    %159 = vmatprep.subr.mxu0 0.0
    %160 = vmatpush1.msra.mxu0 %v128
    %161 = vmatprep.subr.mxu0 0.0
    %162 = vmatpush1.msra.mxu0 %v129
    %163 = vmatprep.subr.mxu0 0.0
    %164 = vmatpush1.msra.mxu0 %v130
    %165 = vmatprep.subr.mxu0 0.0
    %166 = vmatpush1.msra.mxu0 %v131
    %167 = vmatprep.subr.mxu0 0.0
    %168 = vmatpush1.msra.mxu0 %v132
    %169 = vmatprep.subr.mxu0 0.0
    %170 = vmatpush1.msra.mxu0 %v133
    %171 = vmatprep.subr.mxu0 0.0
    %172 = vmatpush1.msra.mxu0 %v134
    %173 = vmatprep.subr.mxu0 0.0
    %174 = vmatpush1.msra.mxu0 %v135
    %175 = vmatprep.subr.mxu0 0.0
    %176 = vmatpush1.msra.mxu0 0.0
    %177 = vmatprep.subr.mxu0 0.0
    %178 = vmatpush1.msra.mxu0 0.0
    %179 = vmatprep.subr.mxu0 0.0
    %180 = vmatpush1.msra.mxu0 0.0
    %181 = vmatprep.subr.mxu0 0.0
    %182 = vmatpush1.msra.mxu0 0.0
    %183 = vmatprep.subr.mxu0 0.0
    %184 = vmatpush1.msra.mxu0 0.0
    %185 = vmatprep.subr.mxu0 0.0
    %186 = vmatpush1.msra.mxu0 0.0
    %187 = vmatprep.subr.mxu0 0.0
    %188 = vmatpush1.msra.mxu0 0.0
    %189 = vmatprep.subr.mxu0 0.0
    %190 = vmatpush1.msra.mxu0 0.0
    %191 = vmatprep.subr.mxu0 0.0
    %192 = vmatpush1.msra.mxu0 0.0
    %193 = vmatprep.subr.mxu0 0.0
    %194 = vmatpush1.msra.mxu0 0.0
    %195 = vmatprep.subr.mxu0 0.0
    %196 = vmatpush1.msra.mxu0 0.0
    %197 = vmatprep.subr.mxu0 0.0
    %198 = vmatpush1.msra.mxu0 0.0
    %199 = vmatprep.subr.mxu0 0.0
    %200 = vmatpush1.msra.mxu0 0.0
    %201 = vmatprep.subr.mxu0 0.0
    %202 = vmatpush1.msra.mxu0 0.0
    %203 = vmatprep.subr.mxu0 0.0
    %204 = vmatpush1.msra.mxu0 0.0
    %205 = vmatprep.subr.mxu0 0.0
    %206 = vmatpush1.msra.mxu0 0.0
    %207 = vmatprep.mubr.f32.mxu0 0.0
    %208 = vmatmul.mubr.f32.gmra.mrb[0].mxu0 %v119
    %v209 = vpop.f32.mrb[0].mxu0
    %v210 = vadd.f32 %v141, %v209
    %v211 = vpop.f32.mrb[0].mxu0
    %212 = vdwg.mxu0
    %v213 = vld [vmem:[#allocation7] sm:$0xff]
    %v214 = vld [vmem:[#allocation7 + $0x8] sm:$0xff]
    %v215 = vld [vmem:[#allocation7 + $0x10] sm:$0xff]
    %v216 = vld [vmem:[#allocation7 + $0x18] sm:$0xff]
    %v217 = vld [vmem:[#allocation7 + $0x20] sm:$0xff]
    %v218 = vld [vmem:[#allocation7 + $0x28] sm:$0xff]
    %v219 = vld [vmem:[#allocation7 + $0x30] sm:$0xff]
    %v220 = vld [vmem:[#allocation7 + $0x38] sm:$0xff]
    %v221 = vld [vmem:[#allocation7 + $0x40] sm:$0xff]
    %v222 = vld [vmem:[#allocation7 + $0x48] sm:$0xff]
    %v223 = vld [vmem:[#allocation7 + $0x50] sm:$0xff]
    %v224 = vld [vmem:[#allocation7 + $0x58] sm:$0xff]
    %v225 = vld [vmem:[#allocation7 + $0x60] sm:$0xff]
    %v226 = vld [vmem:[#allocation7 + $0x68] sm:$0xff]
    %v227 = vld [vmem:[#allocation7 + $0x70] sm:$0xff]
    %v228 = vld [vmem:[#allocation7 + $0x78] sm:$0xff]
    %v229 = vld [vmem:[%s4] sm:$0x1]
    %v231 = vlaneseq
    %v232 = vshrl.u32 %v231, 7
    %v233 = vsub.s32 0, %v232
    %v234 = vrot.slane %v229, %v233
    %236 = vmatprep.subr.mxu0 0.0
    %237 = vmatpush1.msra.mxu0 %v213
    %238 = vmatprep.subr.mxu0 0.0
    %239 = vmatpush1.msra.mxu0 %v214
    %240 = vmatprep.subr.mxu0 0.0
    %241 = vmatpush1.msra.mxu0 %v215
    %242 = vmatprep.subr.mxu0 0.0
    %243 = vmatpush1.msra.mxu0 %v216
    %244 = vmatprep.subr.mxu0 0.0
    %245 = vmatpush1.msra.mxu0 %v217
    %246 = vmatprep.subr.mxu0 0.0
    %247 = vmatpush1.msra.mxu0 %v218
    %248 = vmatprep.subr.mxu0 0.0
    %249 = vmatpush1.msra.mxu0 %v219
    %250 = vmatprep.subr.mxu0 0.0
    %251 = vmatpush1.msra.mxu0 %v220
    %252 = vmatprep.subr.mxu0 0.0
    %253 = vmatpush1.msra.mxu0 %v221
    %254 = vmatprep.subr.mxu0 0.0
    %255 = vmatpush1.msra.mxu0 %v222
    %256 = vmatprep.subr.mxu0 0.0
    %257 = vmatpush1.msra.mxu0 %v223
    %258 = vmatprep.subr.mxu0 0.0
    %259 = vmatpush1.msra.mxu0 %v224
    %260 = vmatprep.subr.mxu0 0.0
    %261 = vmatpush1.msra.mxu0 %v225
    %262 = vmatprep.subr.mxu0 0.0
    %263 = vmatpush1.msra.mxu0 %v226
    %264 = vmatprep.subr.mxu0 0.0
    %265 = vmatpush1.msra.mxu0 %v227
    %266 = vmatprep.subr.mxu0 0.0
    %267 = vmatpush1.msra.mxu0 %v228
    %268 = vmatprep.subr.mxu0 0.0
    %269 = vmatpush1.msra.mxu0 0.0
    %270 = vmatprep.subr.mxu0 0.0
    %271 = vmatpush1.msra.mxu0 0.0
    %272 = vmatprep.subr.mxu0 0.0
    %273 = vmatpush1.msra.mxu0 0.0
    %274 = vmatprep.subr.mxu0 0.0
    %275 = vmatpush1.msra.mxu0 0.0
    %276 = vmatprep.subr.mxu0 0.0
    %277 = vmatpush1.msra.mxu0 0.0
    %278 = vmatprep.subr.mxu0 0.0
    %279 = vmatpush1.msra.mxu0 0.0
    %280 = vmatprep.subr.mxu0 0.0
    %281 = vmatpush1.msra.mxu0 0.0
    %282 = vmatprep.subr.mxu0 0.0
    %283 = vmatpush1.msra.mxu0 0.0
    %284 = vmatprep.subr.mxu0 0.0
    %285 = vmatpush1.msra.mxu0 0.0
    %286 = vmatprep.subr.mxu0 0.0
    %287 = vmatpush1.msra.mxu0 0.0
    %288 = vmatprep.subr.mxu0 0.0
    %289 = vmatpush1.msra.mxu0 0.0
    %290 = vmatprep.subr.mxu0 0.0
    %291 = vmatpush1.msra.mxu0 0.0
    %292 = vmatprep.subr.mxu0 0.0
    %293 = vmatpush1.msra.mxu0 0.0
    %294 = vmatprep.subr.mxu0 0.0
    %295 = vmatpush1.msra.mxu0 0.0
    %296 = vmatprep.subr.mxu0 0.0
    %297 = vmatpush1.msra.mxu0 0.0
    %298 = vmatprep.subr.mxu0 0.0
    %299 = vmatpush1.msra.mxu0 0.0
    %300 = vmatprep.mubr.f32.mxu0 0.0
    %301 = vmatmul.mubr.f32.gmra.mrb[0].mxu0 %v119
    %v302 = vpop.f32.mrb[0].mxu0
    %v303 = vadd.f32 %v234, %v302
    %v304 = vpop.f32.mrb[0].mxu0
    %305 = vdwg.mxu0
    %v306 = vld [vmem:[#allocation8] sm:$0xff]
    %v307 = vld [vmem:[#allocation8 + $0x8] sm:$0xff]
    %v308 = vld [vmem:[#allocation8 + $0x10] sm:$0xff]
    %v309 = vld [vmem:[#allocation8 + $0x18] sm:$0xff]
    %v310 = vld [vmem:[#allocation8 + $0x20] sm:$0xff]
    %v311 = vld [vmem:[#allocation8 + $0x28] sm:$0xff]
    %v312 = vld [vmem:[#allocation8 + $0x30] sm:$0xff]
    %v313 = vld [vmem:[#allocation8 + $0x38] sm:$0xff]
    %v314 = vld [vmem:[#allocation8 + $0x40] sm:$0xff]
    %v315 = vld [vmem:[#allocation8 + $0x48] sm:$0xff]
    %v316 = vld [vmem:[#allocation8 + $0x50] sm:$0xff]
    %v317 = vld [vmem:[#allocation8 + $0x58] sm:$0xff]
    %v318 = vld [vmem:[#allocation8 + $0x60] sm:$0xff]
    %v319 = vld [vmem:[#allocation8 + $0x68] sm:$0xff]
    %v320 = vld [vmem:[#allocation8 + $0x70] sm:$0xff]
    %v321 = vld [vmem:[#allocation8 + $0x78] sm:$0xff]
    %v322 = vld [vmem:[%s6] sm:$0x1]
    %v324 = vlaneseq
    %v325 = vshrl.u32 %v324, 7
    %v326 = vsub.s32 0, %v325
    %v327 = vrot.slane %v322, %v326
    %329 = vmatprep.subr.mxu0 0.0
    %330 = vmatpush1.msra.mxu0 %v306
    %331 = vmatprep.subr.mxu0 0.0
    %332 = vmatpush1.msra.mxu0 %v307
    %333 = vmatprep.subr.mxu0 0.0
    %334 = vmatpush1.msra.mxu0 %v308
    %335 = vmatprep.subr.mxu0 0.0
    %336 = vmatpush1.msra.mxu0 %v309
    %337 = vmatprep.subr.mxu0 0.0
    %338 = vmatpush1.msra.mxu0 %v310
    %339 = vmatprep.subr.mxu0 0.0
    %340 = vmatpush1.msra.mxu0 %v311
    %341 = vmatprep.subr.mxu0 0.0
    %342 = vmatpush1.msra.mxu0 %v312
    %343 = vmatprep.subr.mxu0 0.0
    %344 = vmatpush1.msra.mxu0 %v313
    %345 = vmatprep.subr.mxu0 0.0
    %346 = vmatpush1.msra.mxu0 %v314
    %347 = vmatprep.subr.mxu0 0.0
    %348 = vmatpush1.msra.mxu0 %v315
    %349 = vmatprep.subr.mxu0 0.0
    %350 = vmatpush1.msra.mxu0 %v316
    %351 = vmatprep.subr.mxu0 0.0
    %352 = vmatpush1.msra.mxu0 %v317
    %353 = vmatprep.subr.mxu0 0.0
    %354 = vmatpush1.msra.mxu0 %v318
    %355 = vmatprep.subr.mxu0 0.0
    %356 = vmatpush1.msra.mxu0 %v319
    %357 = vmatprep.subr.mxu0 0.0
    %358 = vmatpush1.msra.mxu0 %v320
    %359 = vmatprep.subr.mxu0 0.0
    %360 = vmatpush1.msra.mxu0 %v321
    %361 = vmatprep.subr.mxu0 0.0
    %362 = vmatpush1.msra.mxu0 0.0
    %363 = vmatprep.subr.mxu0 0.0
    %364 = vmatpush1.msra.mxu0 0.0
    %365 = vmatprep.subr.mxu0 0.0
    %366 = vmatpush1.msra.mxu0 0.0
    %367 = vmatprep.subr.mxu0 0.0
    %368 = vmatpush1.msra.mxu0 0.0
    %369 = vmatprep.subr.mxu0 0.0
    %370 = vmatpush1.msra.mxu0 0.0
    %371 = vmatprep.subr.mxu0 0.0
    %372 = vmatpush1.msra.mxu0 0.0
    %373 = vmatprep.subr.mxu0 0.0
    %374 = vmatpush1.msra.mxu0 0.0
    %375 = vmatprep.subr.mxu0 0.0
    %376 = vmatpush1.msra.mxu0 0.0
    %377 = vmatprep.subr.mxu0 0.0
    %378 = vmatpush1.msra.mxu0 0.0
    %379 = vmatprep.subr.mxu0 0.0
    %380 = vmatpush1.msra.mxu0 0.0
    %381 = vmatprep.subr.mxu0 0.0
    %382 = vmatpush1.msra.mxu0 0.0
    %383 = vmatprep.subr.mxu0 0.0
    %384 = vmatpush1.msra.mxu0 0.0
    %385 = vmatprep.subr.mxu0 0.0
    %386 = vmatpush1.msra.mxu0 0.0
    %387 = vmatprep.subr.mxu0 0.0
    %388 = vmatpush1.msra.mxu0 0.0
    %389 = vmatprep.subr.mxu0 0.0
    %390 = vmatpush1.msra.mxu0 0.0
    %391 = vmatprep.subr.mxu0 0.0
    %392 = vmatpush1.msra.mxu0 0.0
    %393 = vmatprep.mubr.f32.mxu0 0.0
    %394 = vmatmul.mubr.f32.gmra.mrb[0].mxu0 %v119
    %v395 = vpop.f32.mrb[0].mxu0
    %v396 = vadd.f32 %v327, %v395
    %v397 = vpop.f32.mrb[0].mxu0
    %398 = vdwg.mxu0
    %v399 = vlaneseq
    %v400 = vshrl.u32 %v399, 7
    %v401 = vlaneseq
    %v402 = vand.u32 %v401, 127
    %vm403 = vcmp.lt.s32.totalorder %v402, 0
    %v404 = vsub.s32 0, %v402
    %v405 = vsel %vm403, %v404, %v402
    %v406 = vshrl.u32 %v405, 3
    %v407 = vand.u32 %v405, 7
    %v408 = vsub.s32 0, %v407
    %v409 = vsel %vm403, %v408, %v407
    %vm410 = vcmp.ne.s32.totalorder %v409, 0
    %vm411 = vcmp.lt.s32.totalorder %v409, 0
    %vm412 = vmand %vm411, %vm410
    %v413 = vadd.s32 %v409, 8
    %v414 = vsel %vm412, %v413, %v409
    %vm415 = vcmp.eq.s32.totalorder %v400, 0
    %v416 = vsel %vm415, 1, 0
    %v417 = vcvt.s32.f32 %v416
    %v418 = vmul.f32 %v210, %v303
    %v419 = vrot.slane %v303, 7
    %vm420 = vcmp.eq.s32.totalorder %v400, 1
    %v421 = vsel %vm420, 1, 0
    %v422 = vcvt.s32.f32 %v421
    %v423 = vmul.f32 %v210, %v419
    %vm424 = vcmask 64512
    %v426 = vsel %vm424, %v422, 0
    %428 = vmatprep.subr.mxu0 0.0
    %429 = vmatpush1.msra.mxu0 %v423
    %430 = vmatprep.subr.mxu0 0.0
    %431 = vmatpush1.msra.mxu0 0.0
    %432 = vmatprep.subr.mxu0 0.0
    %433 = vmatpush1.msra.mxu0 0.0
    %434 = vmatprep.subr.mxu0 0.0
    %435 = vmatpush1.msra.mxu0 0.0
    %436 = vmatprep.subr.mxu0 0.0
    %437 = vmatpush1.msra.mxu0 0.0
    %438 = vmatprep.subr.mxu0 0.0
    %439 = vmatpush1.msra.mxu0 0.0
    %440 = vmatprep.subr.mxu0 0.0
    %441 = vmatpush1.msra.mxu0 0.0
    %442 = vmatprep.subr.mxu0 0.0
    %443 = vmatpush1.msra.mxu0 0.0
    %444 = vmatprep.subr.mxu0 0.0
    %445 = vmatpush1.msra.mxu0 0.0
    %446 = vmatprep.subr.mxu0 0.0
    %447 = vmatpush1.msra.mxu0 0.0
    %448 = vmatprep.subr.mxu0 0.0
    %449 = vmatpush1.msra.mxu0 0.0
    %450 = vmatprep.subr.mxu0 0.0
    %451 = vmatpush1.msra.mxu0 0.0
    %452 = vmatprep.subr.mxu0 0.0
    %453 = vmatpush1.msra.mxu0 0.0
    %454 = vmatprep.subr.mxu0 0.0
    %455 = vmatpush1.msra.mxu0 0.0
    %456 = vmatprep.subr.mxu0 0.0
    %457 = vmatpush1.msra.mxu0 0.0
    %458 = vmatprep.subr.mxu0 0.0
    %459 = vmatpush1.msra.mxu0 0.0
    %460 = vmatprep.subr.mxu0 0.0
    %461 = vmatpush1.msra.mxu0 0.0
    %462 = vmatprep.subr.mxu0 0.0
    %463 = vmatpush1.msra.mxu0 0.0
    %464 = vmatprep.subr.mxu0 0.0
    %465 = vmatpush1.msra.mxu0 0.0
    %466 = vmatprep.subr.mxu0 0.0
    %467 = vmatpush1.msra.mxu0 0.0
    %468 = vmatprep.subr.mxu0 0.0
    %469 = vmatpush1.msra.mxu0 0.0
    %470 = vmatprep.subr.mxu0 0.0
    %471 = vmatpush1.msra.mxu0 0.0
    %472 = vmatprep.subr.mxu0 0.0
    %473 = vmatpush1.msra.mxu0 0.0
    %474 = vmatprep.subr.mxu0 0.0
    %475 = vmatpush1.msra.mxu0 0.0
    %476 = vmatprep.subr.mxu0 0.0
    %477 = vmatpush1.msra.mxu0 0.0
    %478 = vmatprep.subr.mxu0 0.0
    %479 = vmatpush1.msra.mxu0 0.0
    %480 = vmatprep.subr.mxu0 0.0
    %481 = vmatpush1.msra.mxu0 0.0
    %482 = vmatprep.subr.mxu0 0.0
    %483 = vmatpush1.msra.mxu0 0.0
    %484 = vmatprep.subr.mxu0 0.0
    %485 = vmatpush1.msra.mxu0 0.0
    %486 = vmatprep.subr.mxu0 0.0
    %487 = vmatpush1.msra.mxu0 0.0
    %488 = vmatprep.subr.mxu0 0.0
    %489 = vmatpush1.msra.mxu0 0.0
    %490 = vmatprep.subr.mxu0 0.0
    %491 = vmatpush1.msra.mxu0 0.0
    %492 = vmatprep.mubr.f32.mxu0 0.0
    %493 = vmatmul.mubr.f32.gmra.mrb[0].mxu0 %v426
    %v494 = vpop.f32.mrb[0].mxu0
    %v495 = vadd.f32 0.0, %v494
    %v496 = vpop.f32.mrb[0].mxu0
    %497 = vdwg.mxu0
    %v499 = vsel %vm424, %v417, 0
    %501 = vmatprep.subr.mxu0 0.0
    %502 = vmatpush1.msra.mxu0 %v418
    %503 = vmatprep.subr.mxu0 0.0
    %504 = vmatpush1.msra.mxu0 0.0
    %505 = vmatprep.subr.mxu0 0.0
    %506 = vmatpush1.msra.mxu0 0.0
    %507 = vmatprep.subr.mxu0 0.0
    %508 = vmatpush1.msra.mxu0 0.0
    %509 = vmatprep.subr.mxu0 0.0
    %510 = vmatpush1.msra.mxu0 0.0
    %511 = vmatprep.subr.mxu0 0.0
    %512 = vmatpush1.msra.mxu0 0.0
    %513 = vmatprep.subr.mxu0 0.0
    %514 = vmatpush1.msra.mxu0 0.0
    %515 = vmatprep.subr.mxu0 0.0
    %516 = vmatpush1.msra.mxu0 0.0
    %517 = vmatprep.subr.mxu0 0.0
    %518 = vmatpush1.msra.mxu0 0.0
    %519 = vmatprep.subr.mxu0 0.0
    %520 = vmatpush1.msra.mxu0 0.0
    %521 = vmatprep.subr.mxu0 0.0
    %522 = vmatpush1.msra.mxu0 0.0
    %523 = vmatprep.subr.mxu0 0.0
    %524 = vmatpush1.msra.mxu0 0.0
    %525 = vmatprep.subr.mxu0 0.0
    %526 = vmatpush1.msra.mxu0 0.0
    %527 = vmatprep.subr.mxu0 0.0
    %528 = vmatpush1.msra.mxu0 0.0
    %529 = vmatprep.subr.mxu0 0.0
    %530 = vmatpush1.msra.mxu0 0.0
    %531 = vmatprep.subr.mxu0 0.0
    %532 = vmatpush1.msra.mxu0 0.0
    %533 = vmatprep.subr.mxu0 0.0
    %534 = vmatpush1.msra.mxu0 0.0
    %535 = vmatprep.subr.mxu0 0.0
    %536 = vmatpush1.msra.mxu0 0.0
    %537 = vmatprep.subr.mxu0 0.0
    %538 = vmatpush1.msra.mxu0 0.0
    %539 = vmatprep.subr.mxu0 0.0
    %540 = vmatpush1.msra.mxu0 0.0
    %541 = vmatprep.subr.mxu0 0.0
    %542 = vmatpush1.msra.mxu0 0.0
    %543 = vmatprep.subr.mxu0 0.0
    %544 = vmatpush1.msra.mxu0 0.0
    %545 = vmatprep.subr.mxu0 0.0
    %546 = vmatpush1.msra.mxu0 0.0
    %547 = vmatprep.subr.mxu0 0.0
    %548 = vmatpush1.msra.mxu0 0.0
    %549 = vmatprep.subr.mxu0 0.0
    %550 = vmatpush1.msra.mxu0 0.0
    %551 = vmatprep.subr.mxu0 0.0
    %552 = vmatpush1.msra.mxu0 0.0
    %553 = vmatprep.subr.mxu0 0.0
    %554 = vmatpush1.msra.mxu0 0.0
    %555 = vmatprep.subr.mxu0 0.0
    %556 = vmatpush1.msra.mxu0 0.0
    %557 = vmatprep.subr.mxu0 0.0
    %558 = vmatpush1.msra.mxu0 0.0
    %559 = vmatprep.subr.mxu0 0.0
    %560 = vmatpush1.msra.mxu0 0.0
    %561 = vmatprep.subr.mxu0 0.0
    %562 = vmatpush1.msra.mxu0 0.0
    %563 = vmatprep.subr.mxu0 0.0
    %564 = vmatpush1.msra.mxu0 0.0
    %565 = vmatprep.mubr.f32.mxu0 0.0
    %566 = vmatmul.mubr.f32.gmra.mrb[0].mxu0 %v499
    %v567 = vpop.f32.mrb[0].mxu0
    %v568 = vadd.f32 %v495, %v567
    %v569 = vpop.f32.mrb[0].mxu0
    %570 = vdwg.mxu0
    %v571 = vrot.slane %v303, 6
    %vm572 = vcmp.eq.s32.totalorder %v400, 2
    %v573 = vsel %vm572, 1, 0
    %v574 = vcvt.s32.f32 %v573
    %v575 = vmul.f32 %v210, %v571
    %v577 = vsel %vm424, %v574, 0
    %579 = vmatprep.subr.mxu0 0.0
    %580 = vmatpush1.msra.mxu0 %v575
    %581 = vmatprep.subr.mxu0 0.0
    %582 = vmatpush1.msra.mxu0 0.0
    %583 = vmatprep.subr.mxu0 0.0
    %584 = vmatpush1.msra.mxu0 0.0
    %585 = vmatprep.subr.mxu0 0.0
    %586 = vmatpush1.msra.mxu0 0.0
    %587 = vmatprep.subr.mxu0 0.0
    %588 = vmatpush1.msra.mxu0 0.0
    %589 = vmatprep.subr.mxu0 0.0
    %590 = vmatpush1.msra.mxu0 0.0
    %591 = vmatprep.subr.mxu0 0.0
    %592 = vmatpush1.msra.mxu0 0.0
    %593 = vmatprep.subr.mxu0 0.0
    %594 = vmatpush1.msra.mxu0 0.0
    %595 = vmatprep.subr.mxu0 0.0
    %596 = vmatpush1.msra.mxu0 0.0
    %597 = vmatprep.subr.mxu0 0.0
    %598 = vmatpush1.msra.mxu0 0.0
    %599 = vmatprep.subr.mxu0 0.0
    %600 = vmatpush1.msra.mxu0 0.0
    %601 = vmatprep.subr.mxu0 0.0
    %602 = vmatpush1.msra.mxu0 0.0
    %603 = vmatprep.subr.mxu0 0.0
    %604 = vmatpush1.msra.mxu0 0.0
    %605 = vmatprep.subr.mxu0 0.0
    %606 = vmatpush1.msra.mxu0 0.0
    %607 = vmatprep.subr.mxu0 0.0
    %608 = vmatpush1.msra.mxu0 0.0
    %609 = vmatprep.subr.mxu0 0.0
    %610 = vmatpush1.msra.mxu0 0.0
    %611 = vmatprep.subr.mxu0 0.0
    %612 = vmatpush1.msra.mxu0 0.0
    %613 = vmatprep.subr.mxu0 0.0
    %614 = vmatpush1.msra.mxu0 0.0
    %615 = vmatprep.subr.mxu0 0.0
    %616 = vmatpush1.msra.mxu0 0.0
    %617 = vmatprep.subr.mxu0 0.0
    %618 = vmatpush1.msra.mxu0 0.0
    %619 = vmatprep.subr.mxu0 0.0
    %620 = vmatpush1.msra.mxu0 0.0
    %621 = vmatprep.subr.mxu0 0.0
    %622 = vmatpush1.msra.mxu0 0.0
    %623 = vmatprep.subr.mxu0 0.0
    %624 = vmatpush1.msra.mxu0 0.0
    %625 = vmatprep.subr.mxu0 0.0
    %626 = vmatpush1.msra.mxu0 0.0
    %627 = vmatprep.subr.mxu0 0.0
    %628 = vmatpush1.msra.mxu0 0.0
    %629 = vmatprep.subr.mxu0 0.0
    %630 = vmatpush1.msra.mxu0 0.0
    %631 = vmatprep.subr.mxu0 0.0
    %632 = vmatpush1.msra.mxu0 0.0
    %633 = vmatprep.subr.mxu0 0.0
    %634 = vmatpush1.msra.mxu0 0.0
    %635 = vmatprep.subr.mxu0 0.0
    %636 = vmatpush1.msra.mxu0 0.0
    %637 = vmatprep.subr.mxu0 0.0
    %638 = vmatpush1.msra.mxu0 0.0
    %639 = vmatprep.subr.mxu0 0.0
    %640 = vmatpush1.msra.mxu0 0.0
    %641 = vmatprep.subr.mxu0 0.0
    %642 = vmatpush1.msra.mxu0 0.0
    %643 = vmatprep.mubr.f32.mxu0 0.0
    %644 = vmatmul.mubr.f32.gmra.mrb[0].mxu0 %v577
    %v645 = vpop.f32.mrb[0].mxu0
    %v646 = vadd.f32 0.0, %v645
    %v647 = vpop.f32.mrb[0].mxu0
    %648 = vdwg.mxu0
    %v649 = vadd.f32 %v568, %v646
    %v650 = vrot.slane %v303, 5
    %vm651 = vcmp.eq.s32.totalorder %v400, 3
    %v652 = vsel %vm651, 1, 0
    %v653 = vcvt.s32.f32 %v652
    %v654 = vmul.f32 %v210, %v650
    %v656 = vsel %vm424, %v653, 0
    %658 = vmatprep.subr.mxu0 0.0
    %659 = vmatpush1.msra.mxu0 %v654
    %660 = vmatprep.subr.mxu0 0.0
    %661 = vmatpush1.msra.mxu0 0.0
    %662 = vmatprep.subr.mxu0 0.0
    %663 = vmatpush1.msra.mxu0 0.0
    %664 = vmatprep.subr.mxu0 0.0
    %665 = vmatpush1.msra.mxu0 0.0
    %666 = vmatprep.subr.mxu0 0.0
    %667 = vmatpush1.msra.mxu0 0.0
    %668 = vmatprep.subr.mxu0 0.0
    %669 = vmatpush1.msra.mxu0 0.0
    %670 = vmatprep.subr.mxu0 0.0
    %671 = vmatpush1.msra.mxu0 0.0
    %672 = vmatprep.subr.mxu0 0.0
    %673 = vmatpush1.msra.mxu0 0.0
    %674 = vmatprep.subr.mxu0 0.0
    %675 = vmatpush1.msra.mxu0 0.0
    %676 = vmatprep.subr.mxu0 0.0
    %677 = vmatpush1.msra.mxu0 0.0
    %678 = vmatprep.subr.mxu0 0.0
    %679 = vmatpush1.msra.mxu0 0.0
    %680 = vmatprep.subr.mxu0 0.0
    %681 = vmatpush1.msra.mxu0 0.0
    %682 = vmatprep.subr.mxu0 0.0
    %683 = vmatpush1.msra.mxu0 0.0
    %684 = vmatprep.subr.mxu0 0.0
    %685 = vmatpush1.msra.mxu0 0.0
    %686 = vmatprep.subr.mxu0 0.0
    %687 = vmatpush1.msra.mxu0 0.0
    %688 = vmatprep.subr.mxu0 0.0
    %689 = vmatpush1.msra.mxu0 0.0
    %690 = vmatprep.subr.mxu0 0.0
    %691 = vmatpush1.msra.mxu0 0.0
    %692 = vmatprep.subr.mxu0 0.0
    %693 = vmatpush1.msra.mxu0 0.0
    %694 = vmatprep.subr.mxu0 0.0
    %695 = vmatpush1.msra.mxu0 0.0
    %696 = vmatprep.subr.mxu0 0.0
    %697 = vmatpush1.msra.mxu0 0.0
    %698 = vmatprep.subr.mxu0 0.0
    %699 = vmatpush1.msra.mxu0 0.0
    %700 = vmatprep.subr.mxu0 0.0
    %701 = vmatpush1.msra.mxu0 0.0
    %702 = vmatprep.subr.mxu0 0.0
    %703 = vmatpush1.msra.mxu0 0.0
    %704 = vmatprep.subr.mxu0 0.0
    %705 = vmatpush1.msra.mxu0 0.0
    %706 = vmatprep.subr.mxu0 0.0
    %707 = vmatpush1.msra.mxu0 0.0
    %708 = vmatprep.subr.mxu0 0.0
    %709 = vmatpush1.msra.mxu0 0.0
    %710 = vmatprep.subr.mxu0 0.0
    %711 = vmatpush1.msra.mxu0 0.0
    %712 = vmatprep.subr.mxu0 0.0
    %713 = vmatpush1.msra.mxu0 0.0
    %714 = vmatprep.subr.mxu0 0.0
    %715 = vmatpush1.msra.mxu0 0.0
    %716 = vmatprep.subr.mxu0 0.0
    %717 = vmatpush1.msra.mxu0 0.0
    %718 = vmatprep.subr.mxu0 0.0
    %719 = vmatpush1.msra.mxu0 0.0
    %720 = vmatprep.subr.mxu0 0.0
    %721 = vmatpush1.msra.mxu0 0.0
    %722 = vmatprep.mubr.f32.mxu0 0.0
    %723 = vmatmul.mubr.f32.gmra.mrb[0].mxu0 %v656
    %v724 = vpop.f32.mrb[0].mxu0
    %v725 = vadd.f32 0.0, %v724
    %v726 = vpop.f32.mrb[0].mxu0
    %727 = vdwg.mxu0
    %v728 = vadd.f32 %v649, %v725
    %v729 = vrot.slane %v303, 4
    %vm730 = vcmp.eq.s32.totalorder %v400, 4
    %v731 = vsel %vm730, 1, 0
    %v732 = vcvt.s32.f32 %v731
    %v733 = vmul.f32 %v210, %v729
    %v735 = vsel %vm424, %v732, 0
    %737 = vmatprep.subr.mxu0 0.0
    %738 = vmatpush1.msra.mxu0 %v733
    %739 = vmatprep.subr.mxu0 0.0
    %740 = vmatpush1.msra.mxu0 0.0
    %741 = vmatprep.subr.mxu0 0.0
    %742 = vmatpush1.msra.mxu0 0.0
    %743 = vmatprep.subr.mxu0 0.0
    %744 = vmatpush1.msra.mxu0 0.0
    %745 = vmatprep.subr.mxu0 0.0
    %746 = vmatpush1.msra.mxu0 0.0
    %747 = vmatprep.subr.mxu0 0.0
    %748 = vmatpush1.msra.mxu0 0.0
    %749 = vmatprep.subr.mxu0 0.0
    %750 = vmatpush1.msra.mxu0 0.0
    %751 = vmatprep.subr.mxu0 0.0
    %752 = vmatpush1.msra.mxu0 0.0
    %753 = vmatprep.subr.mxu0 0.0
    %754 = vmatpush1.msra.mxu0 0.0
    %755 = vmatprep.subr.mxu0 0.0
    %756 = vmatpush1.msra.mxu0 0.0
    %757 = vmatprep.subr.mxu0 0.0
    %758 = vmatpush1.msra.mxu0 0.0
    %759 = vmatprep.subr.mxu0 0.0
    %760 = vmatpush1.msra.mxu0 0.0
    %761 = vmatprep.subr.mxu0 0.0
    %762 = vmatpush1.msra.mxu0 0.0
    %763 = vmatprep.subr.mxu0 0.0
    %764 = vmatpush1.msra.mxu0 0.0
    %765 = vmatprep.subr.mxu0 0.0
    %766 = vmatpush1.msra.mxu0 0.0
    %767 = vmatprep.subr.mxu0 0.0
    %768 = vmatpush1.msra.mxu0 0.0
    %769 = vmatprep.subr.mxu0 0.0
    %770 = vmatpush1.msra.mxu0 0.0
    %771 = vmatprep.subr.mxu0 0.0
    %772 = vmatpush1.msra.mxu0 0.0
    %773 = vmatprep.subr.mxu0 0.0
    %774 = vmatpush1.msra.mxu0 0.0
    %775 = vmatprep.subr.mxu0 0.0
    %776 = vmatpush1.msra.mxu0 0.0
    %777 = vmatprep.subr.mxu0 0.0
    %778 = vmatpush1.msra.mxu0 0.0
    %779 = vmatprep.subr.mxu0 0.0
    %780 = vmatpush1.msra.mxu0 0.0
    %781 = vmatprep.subr.mxu0 0.0
    %782 = vmatpush1.msra.mxu0 0.0
    %783 = vmatprep.subr.mxu0 0.0
    %784 = vmatpush1.msra.mxu0 0.0
    %785 = vmatprep.subr.mxu0 0.0
    %786 = vmatpush1.msra.mxu0 0.0
    %787 = vmatprep.subr.mxu0 0.0
    %788 = vmatpush1.msra.mxu0 0.0
    %789 = vmatprep.subr.mxu0 0.0
    %790 = vmatpush1.msra.mxu0 0.0
    %791 = vmatprep.subr.mxu0 0.0
    %792 = vmatpush1.msra.mxu0 0.0
    %793 = vmatprep.subr.mxu0 0.0
    %794 = vmatpush1.msra.mxu0 0.0
    %795 = vmatprep.subr.mxu0 0.0
    %796 = vmatpush1.msra.mxu0 0.0
    %797 = vmatprep.subr.mxu0 0.0
    %798 = vmatpush1.msra.mxu0 0.0
    %799 = vmatprep.subr.mxu0 0.0
    %800 = vmatpush1.msra.mxu0 0.0
    %801 = vmatprep.mubr.f32.mxu0 0.0
    %802 = vmatmul.mubr.f32.gmra.mrb[0].mxu0 %v735
    %v803 = vpop.f32.mrb[0].mxu0
    %v804 = vadd.f32 0.0, %v803
    %v805 = vpop.f32.mrb[0].mxu0
    %806 = vdwg.mxu0
    %v807 = vadd.f32 %v728, %v804
    %v808 = vrot.slane %v303, 3
    %vm809 = vcmp.eq.s32.totalorder %v400, 5
    %v810 = vsel %vm809, 1, 0
    %v811 = vcvt.s32.f32 %v810
    %v812 = vmul.f32 %v210, %v808
    %v814 = vsel %vm424, %v811, 0
    %816 = vmatprep.subr.mxu0 0.0
    %817 = vmatpush1.msra.mxu0 %v812
    %818 = vmatprep.subr.mxu0 0.0
    %819 = vmatpush1.msra.mxu0 0.0
    %820 = vmatprep.subr.mxu0 0.0
    %821 = vmatpush1.msra.mxu0 0.0
    %822 = vmatprep.subr.mxu0 0.0
    %823 = vmatpush1.msra.mxu0 0.0
    %824 = vmatprep.subr.mxu0 0.0
    %825 = vmatpush1.msra.mxu0 0.0
    %826 = vmatprep.subr.mxu0 0.0
    %827 = vmatpush1.msra.mxu0 0.0
    %828 = vmatprep.subr.mxu0 0.0
    %829 = vmatpush1.msra.mxu0 0.0
    %830 = vmatprep.subr.mxu0 0.0
    %831 = vmatpush1.msra.mxu0 0.0
    %832 = vmatprep.subr.mxu0 0.0
    %833 = vmatpush1.msra.mxu0 0.0
    %834 = vmatprep.subr.mxu0 0.0
    %835 = vmatpush1.msra.mxu0 0.0
    %836 = vmatprep.subr.mxu0 0.0
    %837 = vmatpush1.msra.mxu0 0.0
    %838 = vmatprep.subr.mxu0 0.0
    %839 = vmatpush1.msra.mxu0 0.0
    %840 = vmatprep.subr.mxu0 0.0
    %841 = vmatpush1.msra.mxu0 0.0
    %842 = vmatprep.subr.mxu0 0.0
    %843 = vmatpush1.msra.mxu0 0.0
    %844 = vmatprep.subr.mxu0 0.0
    %845 = vmatpush1.msra.mxu0 0.0
    %846 = vmatprep.subr.mxu0 0.0
    %847 = vmatpush1.msra.mxu0 0.0
    %848 = vmatprep.subr.mxu0 0.0
    %849 = vmatpush1.msra.mxu0 0.0
    %850 = vmatprep.subr.mxu0 0.0
    %851 = vmatpush1.msra.mxu0 0.0
    %852 = vmatprep.subr.mxu0 0.0
    %853 = vmatpush1.msra.mxu0 0.0
    %854 = vmatprep.subr.mxu0 0.0
    %855 = vmatpush1.msra.mxu0 0.0
    %856 = vmatprep.subr.mxu0 0.0
    %857 = vmatpush1.msra.mxu0 0.0
    %858 = vmatprep.subr.mxu0 0.0
    %859 = vmatpush1.msra.mxu0 0.0
    %860 = vmatprep.subr.mxu0 0.0
    %861 = vmatpush1.msra.mxu0 0.0
    %862 = vmatprep.subr.mxu0 0.0
    %863 = vmatpush1.msra.mxu0 0.0
    %864 = vmatprep.subr.mxu0 0.0
    %865 = vmatpush1.msra.mxu0 0.0
    %866 = vmatprep.subr.mxu0 0.0
    %867 = vmatpush1.msra.mxu0 0.0
    %868 = vmatprep.subr.mxu0 0.0
    %869 = vmatpush1.msra.mxu0 0.0
    %870 = vmatprep.subr.mxu0 0.0
    %871 = vmatpush1.msra.mxu0 0.0
    %872 = vmatprep.subr.mxu0 0.0
    %873 = vmatpush1.msra.mxu0 0.0
    %874 = vmatprep.subr.mxu0 0.0
    %875 = vmatpush1.msra.mxu0 0.0
    %876 = vmatprep.subr.mxu0 0.0
    %877 = vmatpush1.msra.mxu0 0.0
    %878 = vmatprep.subr.mxu0 0.0
    %879 = vmatpush1.msra.mxu0 0.0
    %880 = vmatprep.mubr.f32.mxu0 0.0
    %881 = vmatmul.mubr.f32.gmra.mrb[0].mxu0 %v814
    %v882 = vpop.f32.mrb[0].mxu0
    %v883 = vadd.f32 0.0, %v882
    %v884 = vpop.f32.mrb[0].mxu0
    %885 = vdwg.mxu0
    %v886 = vadd.f32 %v807, %v883
    %v887 = vrot.slane %v303, 2
    %vm888 = vcmp.eq.s32.totalorder %v400, 6
    %v889 = vsel %vm888, 1, 0
    %v890 = vcvt.s32.f32 %v889
    %v891 = vmul.f32 %v210, %v887
    %v893 = vsel %vm424, %v890, 0
    %895 = vmatprep.subr.mxu0 0.0
    %896 = vmatpush1.msra.mxu0 %v891
    %897 = vmatprep.subr.mxu0 0.0
    %898 = vmatpush1.msra.mxu0 0.0
    %899 = vmatprep.subr.mxu0 0.0
    %900 = vmatpush1.msra.mxu0 0.0
    %901 = vmatprep.subr.mxu0 0.0
    %902 = vmatpush1.msra.mxu0 0.0
    %903 = vmatprep.subr.mxu0 0.0
    %904 = vmatpush1.msra.mxu0 0.0
    %905 = vmatprep.subr.mxu0 0.0
    %906 = vmatpush1.msra.mxu0 0.0
    %907 = vmatprep.subr.mxu0 0.0
    %908 = vmatpush1.msra.mxu0 0.0
    %909 = vmatprep.subr.mxu0 0.0
    %910 = vmatpush1.msra.mxu0 0.0
    %911 = vmatprep.subr.mxu0 0.0
    %912 = vmatpush1.msra.mxu0 0.0
    %913 = vmatprep.subr.mxu0 0.0
    %914 = vmatpush1.msra.mxu0 0.0
    %915 = vmatprep.subr.mxu0 0.0
    %916 = vmatpush1.msra.mxu0 0.0
    %917 = vmatprep.subr.mxu0 0.0
    %918 = vmatpush1.msra.mxu0 0.0
    %919 = vmatprep.subr.mxu0 0.0
    %920 = vmatpush1.msra.mxu0 0.0
    %921 = vmatprep.subr.mxu0 0.0
    %922 = vmatpush1.msra.mxu0 0.0
    %923 = vmatprep.subr.mxu0 0.0
    %924 = vmatpush1.msra.mxu0 0.0
    %925 = vmatprep.subr.mxu0 0.0
    %926 = vmatpush1.msra.mxu0 0.0
    %927 = vmatprep.subr.mxu0 0.0
    %928 = vmatpush1.msra.mxu0 0.0
    %929 = vmatprep.subr.mxu0 0.0
    %930 = vmatpush1.msra.mxu0 0.0
    %931 = vmatprep.subr.mxu0 0.0
    %932 = vmatpush1.msra.mxu0 0.0
    %933 = vmatprep.subr.mxu0 0.0
    %934 = vmatpush1.msra.mxu0 0.0
    %935 = vmatprep.subr.mxu0 0.0
    %936 = vmatpush1.msra.mxu0 0.0
    %937 = vmatprep.subr.mxu0 0.0
    %938 = vmatpush1.msra.mxu0 0.0
    %939 = vmatprep.subr.mxu0 0.0
    %940 = vmatpush1.msra.mxu0 0.0
    %941 = vmatprep.subr.mxu0 0.0
    %942 = vmatpush1.msra.mxu0 0.0
    %943 = vmatprep.subr.mxu0 0.0
    %944 = vmatpush1.msra.mxu0 0.0
    %945 = vmatprep.subr.mxu0 0.0
    %946 = vmatpush1.msra.mxu0 0.0
    %947 = vmatprep.subr.mxu0 0.0
    %948 = vmatpush1.msra.mxu0 0.0
    %949 = vmatprep.subr.mxu0 0.0
    %950 = vmatpush1.msra.mxu0 0.0
    %951 = vmatprep.subr.mxu0 0.0
    %952 = vmatpush1.msra.mxu0 0.0
    %953 = vmatprep.subr.mxu0 0.0
    %954 = vmatpush1.msra.mxu0 0.0
    %955 = vmatprep.subr.mxu0 0.0
    %956 = vmatpush1.msra.mxu0 0.0
    %957 = vmatprep.subr.mxu0 0.0
    %958 = vmatpush1.msra.mxu0 0.0
    %959 = vmatprep.mubr.f32.mxu0 0.0
    %960 = vmatmul.mubr.f32.gmra.mrb[0].mxu0 %v893
    %v961 = vpop.f32.mrb[0].mxu0
    %v962 = vadd.f32 0.0, %v961
    %v963 = vpop.f32.mrb[0].mxu0
    %964 = vdwg.mxu0
    %v965 = vadd.f32 %v886, %v962
    %v966 = vrot.slane %v303, 1
    %vm967 = vcmp.eq.s32.totalorder %v400, 7
    %v968 = vsel %vm967, 1, 0
    %v969 = vcvt.s32.f32 %v968
    %v970 = vmul.f32 %v210, %v966
    %v972 = vsel %vm424, %v969, 0
    %974 = vmatprep.subr.mxu0 0.0
    %975 = vmatpush1.msra.mxu0 %v970
    %976 = vmatprep.subr.mxu0 0.0
    %977 = vmatpush1.msra.mxu0 0.0
    %978 = vmatprep.subr.mxu0 0.0
    %979 = vmatpush1.msra.mxu0 0.0
    %980 = vmatprep.subr.mxu0 0.0
    %981 = vmatpush1.msra.mxu0 0.0
    %982 = vmatprep.subr.mxu0 0.0
    %983 = vmatpush1.msra.mxu0 0.0
    %984 = vmatprep.subr.mxu0 0.0
    %985 = vmatpush1.msra.mxu0 0.0
    %986 = vmatprep.subr.mxu0 0.0
    %987 = vmatpush1.msra.mxu0 0.0
    %988 = vmatprep.subr.mxu0 0.0
    %989 = vmatpush1.msra.mxu0 0.0
    %990 = vmatprep.subr.mxu0 0.0
    %991 = vmatpush1.msra.mxu0 0.0
    %992 = vmatprep.subr.mxu0 0.0
    %993 = vmatpush1.msra.mxu0 0.0
    %994 = vmatprep.subr.mxu0 0.0
    %995 = vmatpush1.msra.mxu0 0.0
    %996 = vmatprep.subr.mxu0 0.0
    %997 = vmatpush1.msra.mxu0 0.0
    %998 = vmatprep.subr.mxu0 0.0
    %999 = vmatpush1.msra.mxu0 0.0
    %1000 = vmatprep.subr.mxu0 0.0
    %1001 = vmatpush1.msra.mxu0 0.0
    %1002 = vmatprep.subr.mxu0 0.0
    %1003 = vmatpush1.msra.mxu0 0.0
    %1004 = vmatprep.subr.mxu0 0.0
    %1005 = vmatpush1.msra.mxu0 0.0
    %1006 = vmatprep.subr.mxu0 0.0
    %1007 = vmatpush1.msra.mxu0 0.0
    %1008 = vmatprep.subr.mxu0 0.0
    %1009 = vmatpush1.msra.mxu0 0.0
    %1010 = vmatprep.subr.mxu0 0.0
    %1011 = vmatpush1.msra.mxu0 0.0
    %1012 = vmatprep.subr.mxu0 0.0
    %1013 = vmatpush1.msra.mxu0 0.0
    %1014 = vmatprep.subr.mxu0 0.0
    %1015 = vmatpush1.msra.mxu0 0.0
    %1016 = vmatprep.subr.mxu0 0.0
    %1017 = vmatpush1.msra.mxu0 0.0
    %1018 = vmatprep.subr.mxu0 0.0
    %1019 = vmatpush1.msra.mxu0 0.0
    %1020 = vmatprep.subr.mxu0 0.0
    %1021 = vmatpush1.msra.mxu0 0.0
    %1022 = vmatprep.subr.mxu0 0.0
    %1023 = vmatpush1.msra.mxu0 0.0
    %1024 = vmatprep.subr.mxu0 0.0
    %1025 = vmatpush1.msra.mxu0 0.0
    %1026 = vmatprep.subr.mxu0 0.0
    %1027 = vmatpush1.msra.mxu0 0.0
    %1028 = vmatprep.subr.mxu0 0.0
    %1029 = vmatpush1.msra.mxu0 0.0
    %1030 = vmatprep.subr.mxu0 0.0
    %1031 = vmatpush1.msra.mxu0 0.0
    %1032 = vmatprep.subr.mxu0 0.0
    %1033 = vmatpush1.msra.mxu0 0.0
    %1034 = vmatprep.subr.mxu0 0.0
    %1035 = vmatpush1.msra.mxu0 0.0
    %1036 = vmatprep.subr.mxu0 0.0
    %1037 = vmatpush1.msra.mxu0 0.0
    %1038 = vmatprep.mubr.f32.mxu0 0.0
    %1039 = vmatmul.mubr.f32.gmra.mrb[0].mxu0 %v972
    %v1040 = vpop.f32.mrb[0].mxu0
    %v1041 = vadd.f32 0.0, %v1040
    %v1042 = vpop.f32.mrb[0].mxu0
    %1043 = vdwg.mxu0
    %v1044 = vadd.f32 %v965, %v1041
    %v1045 = vrot.slane %v1044, 4
    %v1046 = vmax.f32 %v1044, %v1045
    %v1047 = vrot.slane %v1046, 2
    %v1048 = vmax.f32 %v1046, %v1047
    %v1049 = vrot.slane %v1048, 1
    %v1050 = vmax.f32 %v1048, %v1049
    %vm1051 = vcmp.eq.f32.partialorder %v1044, %v1050
    %v1052 = vsel %vm1051, %v400, 8
    %v1053 = vrot.slane %v1052, 4
    %vm1054 = vcmp.lt.s32.totalorder %v1052, %v1053
    %v1055 = vsel %vm1054, %v1052, %v1053
    %v1056 = vrot.slane %v1055, 2
    %vm1057 = vcmp.lt.s32.totalorder %v1055, %v1056
    %v1058 = vsel %vm1057, %v1055, %v1056
    %v1059 = vrot.slane %v1058, 1
    %vm1060 = vcmp.lt.s32.totalorder %v1058, %v1059
    %v1061 = vsel %vm1060, %v1058, %v1059
    %vm1062 = vcmp.eq.s32.totalorder %v400, %v1061
    %v1063 = vsel %vm1062, -inf, %v1044
    %v1064 = vrot.slane %v1063, 4
    %v1065 = vmax.f32 %v1063, %v1064
    %v1066 = vrot.slane %v1065, 2
    %v1067 = vmax.f32 %v1065, %v1066
    %v1068 = vrot.slane %v1067, 1
    %v1069 = vmax.f32 %v1067, %v1068
    %vm1070 = vcmp.eq.f32.partialorder %v1063, %v1069
    %v1071 = vsel %vm1070, %v400, 8
    %v1072 = vrot.slane %v1071, 4
    %vm1073 = vcmp.lt.s32.totalorder %v1071, %v1072
    %v1074 = vsel %vm1073, %v1071, %v1072
    %v1075 = vrot.slane %v1074, 2
    %vm1076 = vcmp.lt.s32.totalorder %v1074, %v1075
    %v1077 = vsel %vm1076, %v1074, %v1075
    %v1078 = vrot.slane %v1077, 1
    %vm1079 = vcmp.lt.s32.totalorder %v1077, %v1078
    %v1080 = vsel %vm1079, %v1077, %v1078
    %vm1081 = vcmp.eq.s32.totalorder %v400, %v1080
    %v1082 = vsel %vm1081, -inf, %v1063
    %v1083 = vrot.slane %v1082, 4
    %v1084 = vmax.f32 %v1082, %v1083
    %v1085 = vrot.slane %v1084, 2
    %v1086 = vmax.f32 %v1084, %v1085
    %v1087 = vrot.slane %v1086, 1
    %v1088 = vmax.f32 %v1086, %v1087
    %vm1089 = vcmp.eq.f32.partialorder %v1082, %v1088
    %v1090 = vsel %vm1089, %v400, 8
    %v1091 = vrot.slane %v1090, 4
    %vm1092 = vcmp.lt.s32.totalorder %v1090, %v1091
    %v1093 = vsel %vm1092, %v1090, %v1091
    %v1094 = vrot.slane %v1093, 2
    %vm1095 = vcmp.lt.s32.totalorder %v1093, %v1094
    %v1096 = vsel %vm1095, %v1093, %v1094
    %v1097 = vrot.slane %v1096, 1
    %vm1098 = vcmp.lt.s32.totalorder %v1096, %v1097
    %v1099 = vsel %vm1098, %v1096, %v1097
    %vm1100 = vcmp.eq.s32.totalorder %v400, %v1099
    %v1101 = vsel %vm1100, -inf, %v1082
    %v1102 = vrot.slane %v1101, 4
    %v1103 = vmax.f32 %v1101, %v1102
    %v1104 = vrot.slane %v1103, 2
    %v1105 = vmax.f32 %v1103, %v1104
    %v1106 = vrot.slane %v1105, 1
    %v1107 = vmax.f32 %v1105, %v1106
    %vm1108 = vcmp.eq.f32.partialorder %v1101, %v1107
    %v1109 = vsel %vm1108, %v400, 8
    %v1110 = vrot.slane %v1109, 4
    %vm1111 = vcmp.lt.s32.totalorder %v1109, %v1110
    %v1112 = vsel %vm1111, %v1109, %v1110
    %v1113 = vrot.slane %v1112, 2
    %vm1114 = vcmp.lt.s32.totalorder %v1112, %v1113
    %v1115 = vsel %vm1114, %v1112, %v1113
    %v1116 = vrot.slane %v1115, 1
    %vm1117 = vcmp.lt.s32.totalorder %v1115, %v1116
    %v1118 = vsel %vm1117, %v1115, %v1116
    %v1119 = vsub.f32 %v1050, %v1050
    %v1120 = vmul.f32 %v1119, 1.442695
    %v1121 = vpow.pop %v1120
    %v1122 = vsub.f32 %v1069, %v1050
    %v1123 = vmul.f32 %v1122, 1.442695
    %v1124 = vpow.pop %v1123
    %v1125 = vsub.f32 %v1088, %v1050
    %v1126 = vmul.f32 %v1125, 1.442695
    %v1127 = vpow.pop %v1126
    %v1128 = vsub.f32 %v1107, %v1050
    %v1129 = vmul.f32 %v1128, 1.442695
    %v1130 = vpow.pop %v1129
    %v1131 = vadd.f32 %v1121, %v1124
    %v1132 = vadd.f32 %v1131, %v1127
    %v1133 = vadd.f32 %v1132, %v1130
    %v1134 = vrcp.pop %v1133
    %v1135 = vadd.s32 %v1061, %v414
    %vm1136 = vcmp.lt.s32.totalorder %v1135, 7
    %v1137 = vsel %vm1136, %v1135, 7
    %vm1138 = vcmp.eq.s32.totalorder %v400, %v1137
    %v1139 = vmul.f32 %v1121, %v1134
    %v1140 = vsel %vm1138, %v1139, 0.0
    %v1141 = vadd.f32 %v1140, 0.0
    %v1142 = vadd.s32 %v1080, %v414
    %vm1143 = vcmp.lt.s32.totalorder %v1142, 7
    %v1144 = vsel %vm1143, %v1142, 7
    %vm1145 = vcmp.eq.s32.totalorder %v400, %v1144
    %v1146 = vmul.f32 %v1124, %v1134
    %v1147 = vsel %vm1145, %v1146, 0.0
    %v1148 = vadd.f32 %v1141, %v1147
    %v1149 = vadd.s32 %v1099, %v414
    %vm1150 = vcmp.lt.s32.totalorder %v1149, 7
    %v1151 = vsel %vm1150, %v1149, 7
    %vm1152 = vcmp.eq.s32.totalorder %v400, %v1151
    %v1153 = vmul.f32 %v1127, %v1134
    %v1154 = vsel %vm1152, %v1153, 0.0
    %v1155 = vadd.f32 %v1148, %v1154
    %v1156 = vadd.s32 %v1118, %v414
    %vm1157 = vcmp.lt.s32.totalorder %v1156, 7
    %v1158 = vsel %vm1157, %v1156, 7
    %vm1159 = vcmp.eq.s32.totalorder %v400, %v1158
    %v1160 = vmul.f32 %v1130, %v1134
    %v1161 = vsel %vm1159, %v1160, 0.0
    %v1162 = vadd.f32 %v1155, %v1161
    %v1163 = vmul.f32 %v396, %v1162
    %v1164 = vsub.s32 %v402, %v400
    %vm1165 = vcmp.lt.s32.totalorder %v1164, 0
    %v1166 = vsub.s32 0, %v1164
    %v1167 = vsel %vm1165, %v1166, %v1164
    %vm1168 = vcmp.le.s32.totalorder %v1167, 1
    %v1169 = vsel %vm1168, 0.33333334, 0.0
    %v1171 = vsel %vm424, 1.0, 0
    %1173 = vmatprep.subr.mxu0 0.0
    %1174 = vmatpush1.msra.mxu0 %v1163
    %1175 = vmatprep.subr.mxu0 0.0
    %1176 = vmatpush1.msra.mxu0 0.0
    %1177 = vmatprep.subr.mxu0 0.0
    %1178 = vmatpush1.msra.mxu0 0.0
    %1179 = vmatprep.subr.mxu0 0.0
    %1180 = vmatpush1.msra.mxu0 0.0
    %1181 = vmatprep.subr.mxu0 0.0
    %1182 = vmatpush1.msra.mxu0 0.0
    %1183 = vmatprep.subr.mxu0 0.0
    %1184 = vmatpush1.msra.mxu0 0.0
    %1185 = vmatprep.subr.mxu0 0.0
    %1186 = vmatpush1.msra.mxu0 0.0
    %1187 = vmatprep.subr.mxu0 0.0
    %1188 = vmatpush1.msra.mxu0 0.0
    %1189 = vmatprep.subr.mxu0 0.0
    %1190 = vmatpush1.msra.mxu0 0.0
    %1191 = vmatprep.subr.mxu0 0.0
    %1192 = vmatpush1.msra.mxu0 0.0
    %1193 = vmatprep.subr.mxu0 0.0
    %1194 = vmatpush1.msra.mxu0 0.0
    %1195 = vmatprep.subr.mxu0 0.0
    %1196 = vmatpush1.msra.mxu0 0.0
    %1197 = vmatprep.subr.mxu0 0.0
    %1198 = vmatpush1.msra.mxu0 0.0
    %1199 = vmatprep.subr.mxu0 0.0
    %1200 = vmatpush1.msra.mxu0 0.0
    %1201 = vmatprep.subr.mxu0 0.0
    %1202 = vmatpush1.msra.mxu0 0.0
    %1203 = vmatprep.subr.mxu0 0.0
    %1204 = vmatpush1.msra.mxu0 0.0
    %1205 = vmatprep.subr.mxu0 0.0
    %1206 = vmatpush1.msra.mxu0 0.0
    %1207 = vmatprep.subr.mxu0 0.0
    %1208 = vmatpush1.msra.mxu0 0.0
    %1209 = vmatprep.subr.mxu0 0.0
    %1210 = vmatpush1.msra.mxu0 0.0
    %1211 = vmatprep.subr.mxu0 0.0
    %1212 = vmatpush1.msra.mxu0 0.0
    %1213 = vmatprep.subr.mxu0 0.0
    %1214 = vmatpush1.msra.mxu0 0.0
    %1215 = vmatprep.subr.mxu0 0.0
    %1216 = vmatpush1.msra.mxu0 0.0
    %1217 = vmatprep.subr.mxu0 0.0
    %1218 = vmatpush1.msra.mxu0 0.0
    %1219 = vmatprep.subr.mxu0 0.0
    %1220 = vmatpush1.msra.mxu0 0.0
    %1221 = vmatprep.subr.mxu0 0.0
    %1222 = vmatpush1.msra.mxu0 0.0
    %1223 = vmatprep.subr.mxu0 0.0
    %1224 = vmatpush1.msra.mxu0 0.0
    %1225 = vmatprep.subr.mxu0 0.0
    %1226 = vmatpush1.msra.mxu0 0.0
    %1227 = vmatprep.subr.mxu0 0.0
    %1228 = vmatpush1.msra.mxu0 0.0
    %1229 = vmatprep.subr.mxu0 0.0
    %1230 = vmatpush1.msra.mxu0 0.0
    %1231 = vmatprep.subr.mxu0 0.0
    %1232 = vmatpush1.msra.mxu0 0.0
    %1233 = vmatprep.subr.mxu0 0.0
    %1234 = vmatpush1.msra.mxu0 0.0
    %1235 = vmatprep.subr.mxu0 0.0
    %1236 = vmatpush1.msra.mxu0 0.0
    %1237 = vmatprep.mubr.f32.mxu0 0.0
    %1238 = vmatmul.mubr.f32.gmra.mrb[0].mxu0 %v1171
    %v1239 = vpop.f32.mrb[0].mxu0
    %v1240 = vadd.f32 %v119, %v1239
    %v1241 = vpop.f32.mrb[0].mxu0
    %1242 = vdwg.mxu0
    %v1244 = vsel %vm424, %v1169, 0
    %1246 = vmatprep.subr.mxu0 0.0
    %1247 = vmatpush1.msra.mxu0 %v1240
    %1248 = vmatprep.subr.mxu0 0.0
    %1249 = vmatpush1.msra.mxu0 0.0
    %1250 = vmatprep.subr.mxu0 0.0
    %1251 = vmatpush1.msra.mxu0 0.0
    %1252 = vmatprep.subr.mxu0 0.0
    %1253 = vmatpush1.msra.mxu0 0.0
    %1254 = vmatprep.subr.mxu0 0.0
    %1255 = vmatpush1.msra.mxu0 0.0
    %1256 = vmatprep.subr.mxu0 0.0
    %1257 = vmatpush1.msra.mxu0 0.0
    %1258 = vmatprep.subr.mxu0 0.0
    %1259 = vmatpush1.msra.mxu0 0.0
    %1260 = vmatprep.subr.mxu0 0.0
    %1261 = vmatpush1.msra.mxu0 0.0
    %1262 = vmatprep.subr.mxu0 0.0
    %1263 = vmatpush1.msra.mxu0 0.0
    %1264 = vmatprep.subr.mxu0 0.0
    %1265 = vmatpush1.msra.mxu0 0.0
    %1266 = vmatprep.subr.mxu0 0.0
    %1267 = vmatpush1.msra.mxu0 0.0
    %1268 = vmatprep.subr.mxu0 0.0
    %1269 = vmatpush1.msra.mxu0 0.0
    %1270 = vmatprep.subr.mxu0 0.0
    %1271 = vmatpush1.msra.mxu0 0.0
    %1272 = vmatprep.subr.mxu0 0.0
    %1273 = vmatpush1.msra.mxu0 0.0
    %1274 = vmatprep.subr.mxu0 0.0
    %1275 = vmatpush1.msra.mxu0 0.0
    %1276 = vmatprep.subr.mxu0 0.0
    %1277 = vmatpush1.msra.mxu0 0.0
    %1278 = vmatprep.subr.mxu0 0.0
    %1279 = vmatpush1.msra.mxu0 0.0
    %1280 = vmatprep.subr.mxu0 0.0
    %1281 = vmatpush1.msra.mxu0 0.0
    %1282 = vmatprep.subr.mxu0 0.0
    %1283 = vmatpush1.msra.mxu0 0.0
    %1284 = vmatprep.subr.mxu0 0.0
    %1285 = vmatpush1.msra.mxu0 0.0
    %1286 = vmatprep.subr.mxu0 0.0
    %1287 = vmatpush1.msra.mxu0 0.0
    %1288 = vmatprep.subr.mxu0 0.0
    %1289 = vmatpush1.msra.mxu0 0.0
    %1290 = vmatprep.subr.mxu0 0.0
    %1291 = vmatpush1.msra.mxu0 0.0
    %1292 = vmatprep.subr.mxu0 0.0
    %1293 = vmatpush1.msra.mxu0 0.0
    %1294 = vmatprep.subr.mxu0 0.0
    %1295 = vmatpush1.msra.mxu0 0.0
    %1296 = vmatprep.subr.mxu0 0.0
    %1297 = vmatpush1.msra.mxu0 0.0
    %1298 = vmatprep.subr.mxu0 0.0
    %1299 = vmatpush1.msra.mxu0 0.0
    %1300 = vmatprep.subr.mxu0 0.0
    %1301 = vmatpush1.msra.mxu0 0.0
    %1302 = vmatprep.subr.mxu0 0.0
    %1303 = vmatpush1.msra.mxu0 0.0
    %1304 = vmatprep.subr.mxu0 0.0
    %1305 = vmatpush1.msra.mxu0 0.0
    %1306 = vmatprep.subr.mxu0 0.0
    %1307 = vmatpush1.msra.mxu0 0.0
    %1308 = vmatprep.subr.mxu0 0.0
    %1309 = vmatpush1.msra.mxu0 0.0
    %1310 = vmatprep.mubr.f32.mxu0 0.0
    %1311 = vmatmul.mubr.f32.gmra.mrb[0].mxu0 %v1244
    %v1312 = vpop.f32.mrb[0].mxu0
    %v1313 = vadd.f32 0.0, %v1312
    %v1314 = vpop.f32.mrb[0].mxu0
    %1315 = vdwg.mxu0
    %v1316 = vsub.f32 %v1240, %v1313
    %v1317 = vld [vmem:[#allocation10] sm:$0xff]
    %v1318 = vld [vmem:[#allocation10 + $0x8] sm:$0xff]
    %v1319 = vld [vmem:[#allocation10 + $0x10] sm:$0xff]
    %v1320 = vld [vmem:[#allocation10 + $0x18] sm:$0xff]
    %v1321 = vld [vmem:[#allocation10 + $0x20] sm:$0xff]
    %v1322 = vld [vmem:[#allocation10 + $0x28] sm:$0xff]
    %v1323 = vld [vmem:[#allocation10 + $0x30] sm:$0xff]
    %v1324 = vld [vmem:[#allocation10 + $0x38] sm:$0xff]
    %v1325 = vld [vmem:[#allocation10 + $0x40] sm:$0xff]
    %v1326 = vld [vmem:[#allocation10 + $0x48] sm:$0xff]
    %v1327 = vld [vmem:[#allocation10 + $0x50] sm:$0xff]
    %v1328 = vld [vmem:[#allocation10 + $0x58] sm:$0xff]
    %v1329 = vld [vmem:[#allocation10 + $0x60] sm:$0xff]
    %v1330 = vld [vmem:[#allocation10 + $0x68] sm:$0xff]
    %v1331 = vld [vmem:[#allocation10 + $0x70] sm:$0xff]
    %v1332 = vld [vmem:[#allocation10 + $0x78] sm:$0xff]
    %v1333 = vld [vmem:[%s8] sm:$0x1]
    %v1335 = vlaneseq
    %v1336 = vshrl.u32 %v1335, 7
    %v1337 = vsub.s32 0, %v1336
    %v1338 = vrot.slane %v1333, %v1337
    %1340 = vmatprep.subr.mxu0 0.0
    %1341 = vmatpush1.msra.mxu0 %v1317
    %1342 = vmatprep.subr.mxu0 0.0
    %1343 = vmatpush1.msra.mxu0 %v1318
    %1344 = vmatprep.subr.mxu0 0.0
    %1345 = vmatpush1.msra.mxu0 %v1319
    %1346 = vmatprep.subr.mxu0 0.0
    %1347 = vmatpush1.msra.mxu0 %v1320
    %1348 = vmatprep.subr.mxu0 0.0
    %1349 = vmatpush1.msra.mxu0 %v1321
    %1350 = vmatprep.subr.mxu0 0.0
    %1351 = vmatpush1.msra.mxu0 %v1322
    %1352 = vmatprep.subr.mxu0 0.0
    %1353 = vmatpush1.msra.mxu0 %v1323
    %1354 = vmatprep.subr.mxu0 0.0
    %1355 = vmatpush1.msra.mxu0 %v1324
    %1356 = vmatprep.subr.mxu0 0.0
    %1357 = vmatpush1.msra.mxu0 %v1325
    %1358 = vmatprep.subr.mxu0 0.0
    %1359 = vmatpush1.msra.mxu0 %v1326
    %1360 = vmatprep.subr.mxu0 0.0
    %1361 = vmatpush1.msra.mxu0 %v1327
    %1362 = vmatprep.subr.mxu0 0.0
    %1363 = vmatpush1.msra.mxu0 %v1328
    %1364 = vmatprep.subr.mxu0 0.0
    %1365 = vmatpush1.msra.mxu0 %v1329
    %1366 = vmatprep.subr.mxu0 0.0
    %1367 = vmatpush1.msra.mxu0 %v1330
    %1368 = vmatprep.subr.mxu0 0.0
    %1369 = vmatpush1.msra.mxu0 %v1331
    %1370 = vmatprep.subr.mxu0 0.0
    %1371 = vmatpush1.msra.mxu0 %v1332
    %1372 = vmatprep.subr.mxu0 0.0
    %1373 = vmatpush1.msra.mxu0 0.0
    %1374 = vmatprep.subr.mxu0 0.0
    %1375 = vmatpush1.msra.mxu0 0.0
    %1376 = vmatprep.subr.mxu0 0.0
    %1377 = vmatpush1.msra.mxu0 0.0
    %1378 = vmatprep.subr.mxu0 0.0
    %1379 = vmatpush1.msra.mxu0 0.0
    %1380 = vmatprep.subr.mxu0 0.0
    %1381 = vmatpush1.msra.mxu0 0.0
    %1382 = vmatprep.subr.mxu0 0.0
    %1383 = vmatpush1.msra.mxu0 0.0
    %1384 = vmatprep.subr.mxu0 0.0
    %1385 = vmatpush1.msra.mxu0 0.0
    %1386 = vmatprep.subr.mxu0 0.0
    %1387 = vmatpush1.msra.mxu0 0.0
    %1388 = vmatprep.subr.mxu0 0.0
    %1389 = vmatpush1.msra.mxu0 0.0
    %1390 = vmatprep.subr.mxu0 0.0
    %1391 = vmatpush1.msra.mxu0 0.0
    %1392 = vmatprep.subr.mxu0 0.0
    %1393 = vmatpush1.msra.mxu0 0.0
    %1394 = vmatprep.subr.mxu0 0.0
    %1395 = vmatpush1.msra.mxu0 0.0
    %1396 = vmatprep.subr.mxu0 0.0
    %1397 = vmatpush1.msra.mxu0 0.0
    %1398 = vmatprep.subr.mxu0 0.0
    %1399 = vmatpush1.msra.mxu0 0.0
    %1400 = vmatprep.subr.mxu0 0.0
    %1401 = vmatpush1.msra.mxu0 0.0
    %1402 = vmatprep.subr.mxu0 0.0
    %1403 = vmatpush1.msra.mxu0 0.0
    %1404 = vmatprep.mubr.f32.mxu0 0.0
    %1405 = vmatmul.mubr.f32.gmra.mrb[0].mxu0 %v1316
    %v1406 = vpop.f32.mrb[0].mxu0
    %v1407 = vadd.f32 %v1338, %v1406
    %v1408 = vpop.f32.mrb[0].mxu0
    %1409 = vdwg.mxu0
    %v1410 = vmax.f32 %v1407, 0.0
    %v1411 = vld [vmem:[#allocation11] sm:$0xff]
    %v1412 = vld [vmem:[#allocation11 + $0x8] sm:$0xff]
    %v1413 = vld [vmem:[#allocation11 + $0x10] sm:$0xff]
    %v1414 = vld [vmem:[#allocation11 + $0x18] sm:$0xff]
    %v1415 = vld [vmem:[#allocation11 + $0x20] sm:$0xff]
    %v1416 = vld [vmem:[#allocation11 + $0x28] sm:$0xff]
    %v1417 = vld [vmem:[#allocation11 + $0x30] sm:$0xff]
    %v1418 = vld [vmem:[#allocation11 + $0x38] sm:$0xff]
    %v1419 = vld [vmem:[#allocation11 + $0x40] sm:$0xff]
    %v1420 = vld [vmem:[#allocation11 + $0x48] sm:$0xff]
    %v1421 = vld [vmem:[#allocation11 + $0x50] sm:$0xff]
    %v1422 = vld [vmem:[#allocation11 + $0x58] sm:$0xff]
    %v1423 = vld [vmem:[#allocation11 + $0x60] sm:$0xff]
    %v1424 = vld [vmem:[#allocation11 + $0x68] sm:$0xff]
    %v1425 = vld [vmem:[#allocation11 + $0x70] sm:$0xff]
    %v1426 = vld [vmem:[#allocation11 + $0x78] sm:$0xff]
    %v1427 = vld [vmem:[%s10] sm:$0x1]
    %v1429 = vlaneseq
    %v1430 = vshrl.u32 %v1429, 7
    %v1431 = vsub.s32 0, %v1430
    %v1432 = vrot.slane %v1427, %v1431
    %1434 = vmatprep.subr.mxu0 0.0
    %1435 = vmatpush1.msra.mxu0 %v1411
    %1436 = vmatprep.subr.mxu0 0.0
    %1437 = vmatpush1.msra.mxu0 %v1412
    %1438 = vmatprep.subr.mxu0 0.0
    %1439 = vmatpush1.msra.mxu0 %v1413
    %1440 = vmatprep.subr.mxu0 0.0
    %1441 = vmatpush1.msra.mxu0 %v1414
    %1442 = vmatprep.subr.mxu0 0.0
    %1443 = vmatpush1.msra.mxu0 %v1415
    %1444 = vmatprep.subr.mxu0 0.0
    %1445 = vmatpush1.msra.mxu0 %v1416
    %1446 = vmatprep.subr.mxu0 0.0
    %1447 = vmatpush1.msra.mxu0 %v1417
    %1448 = vmatprep.subr.mxu0 0.0
    %1449 = vmatpush1.msra.mxu0 %v1418
    %1450 = vmatprep.subr.mxu0 0.0
    %1451 = vmatpush1.msra.mxu0 %v1419
    %1452 = vmatprep.subr.mxu0 0.0
    %1453 = vmatpush1.msra.mxu0 %v1420
    %1454 = vmatprep.subr.mxu0 0.0
    %1455 = vmatpush1.msra.mxu0 %v1421
    %1456 = vmatprep.subr.mxu0 0.0
    %1457 = vmatpush1.msra.mxu0 %v1422
    %1458 = vmatprep.subr.mxu0 0.0
    %1459 = vmatpush1.msra.mxu0 %v1423
    %1460 = vmatprep.subr.mxu0 0.0
    %1461 = vmatpush1.msra.mxu0 %v1424
    %1462 = vmatprep.subr.mxu0 0.0
    %1463 = vmatpush1.msra.mxu0 %v1425
    %1464 = vmatprep.subr.mxu0 0.0
    %1465 = vmatpush1.msra.mxu0 %v1426
    %1466 = vmatprep.subr.mxu0 0.0
    %1467 = vmatpush1.msra.mxu0 0.0
    %1468 = vmatprep.subr.mxu0 0.0
    %1469 = vmatpush1.msra.mxu0 0.0
    %1470 = vmatprep.subr.mxu0 0.0
    %1471 = vmatpush1.msra.mxu0 0.0
    %1472 = vmatprep.subr.mxu0 0.0
    %1473 = vmatpush1.msra.mxu0 0.0
    %1474 = vmatprep.subr.mxu0 0.0
    %1475 = vmatpush1.msra.mxu0 0.0
    %1476 = vmatprep.subr.mxu0 0.0
    %1477 = vmatpush1.msra.mxu0 0.0
    %1478 = vmatprep.subr.mxu0 0.0
    %1479 = vmatpush1.msra.mxu0 0.0
    %1480 = vmatprep.subr.mxu0 0.0
    %1481 = vmatpush1.msra.mxu0 0.0
    %1482 = vmatprep.subr.mxu0 0.0
    %1483 = vmatpush1.msra.mxu0 0.0
    %1484 = vmatprep.subr.mxu0 0.0
    %1485 = vmatpush1.msra.mxu0 0.0
    %1486 = vmatprep.subr.mxu0 0.0
    %1487 = vmatpush1.msra.mxu0 0.0
    %1488 = vmatprep.subr.mxu0 0.0
    %1489 = vmatpush1.msra.mxu0 0.0
    %1490 = vmatprep.subr.mxu0 0.0
    %1491 = vmatpush1.msra.mxu0 0.0
    %1492 = vmatprep.subr.mxu0 0.0
    %1493 = vmatpush1.msra.mxu0 0.0
    %1494 = vmatprep.subr.mxu0 0.0
    %1495 = vmatpush1.msra.mxu0 0.0
    %1496 = vmatprep.subr.mxu0 0.0
    %1497 = vmatpush1.msra.mxu0 0.0
    %1498 = vmatprep.mubr.f32.mxu0 0.0
    %1499 = vmatmul.mubr.f32.gmra.mrb[0].mxu0 %v1410
    %v1500 = vpop.f32.mrb[0].mxu0
    %v1501 = vadd.f32 %v1432, %v1500
    %v1502 = vpop.f32.mrb[0].mxu0
    %1503 = vdwg.mxu0
    %v1504 = vadd.f32 %v1501, %v1316
    %1505 = vmatprep.subr.mxu0 0.0
    %1506 = vmatpush1.msra.mxu0 %v1504
    %1507 = vmatprep.subr.mxu0 0.0
    %1508 = vmatpush1.msra.mxu0 0.0
    %1509 = vmatprep.subr.mxu0 0.0
    %1510 = vmatpush1.msra.mxu0 0.0
    %1511 = vmatprep.subr.mxu0 0.0
    %1512 = vmatpush1.msra.mxu0 0.0
    %1513 = vmatprep.subr.mxu0 0.0
    %1514 = vmatpush1.msra.mxu0 0.0
    %1515 = vmatprep.subr.mxu0 0.0
    %1516 = vmatpush1.msra.mxu0 0.0
    %1517 = vmatprep.subr.mxu0 0.0
    %1518 = vmatpush1.msra.mxu0 0.0
    %1519 = vmatprep.subr.mxu0 0.0
    %1520 = vmatpush1.msra.mxu0 0.0
    %1521 = vmatprep.subr.mxu0 0.0
    %1522 = vmatpush1.msra.mxu0 0.0
    %1523 = vmatprep.subr.mxu0 0.0
    %1524 = vmatpush1.msra.mxu0 0.0
    %1525 = vmatprep.subr.mxu0 0.0
    %1526 = vmatpush1.msra.mxu0 0.0
    %1527 = vmatprep.subr.mxu0 0.0
    %1528 = vmatpush1.msra.mxu0 0.0
    %1529 = vmatprep.subr.mxu0 0.0
    %1530 = vmatpush1.msra.mxu0 0.0
    %1531 = vmatprep.subr.mxu0 0.0
    %1532 = vmatpush1.msra.mxu0 0.0
    %1533 = vmatprep.subr.mxu0 0.0
    %1534 = vmatpush1.msra.mxu0 0.0
    %1535 = vmatprep.subr.mxu0 0.0
    %1536 = vmatpush1.msra.mxu0 0.0
    %1537 = vmatprep.subr.mxu0 0.0
    %1538 = vmatpush1.msra.mxu0 0.0
    %1539 = vmatprep.subr.mxu0 0.0
    %1540 = vmatpush1.msra.mxu0 0.0
    %1541 = vmatprep.subr.mxu0 0.0
    %1542 = vmatpush1.msra.mxu0 0.0
    %1543 = vmatprep.subr.mxu0 0.0
    %1544 = vmatpush1.msra.mxu0 0.0
    %1545 = vmatprep.subr.mxu0 0.0
    %1546 = vmatpush1.msra.mxu0 0.0
    %1547 = vmatprep.subr.mxu0 0.0
    %1548 = vmatpush1.msra.mxu0 0.0
    %1549 = vmatprep.subr.mxu0 0.0
    %1550 = vmatpush1.msra.mxu0 0.0
    %1551 = vmatprep.subr.mxu0 0.0
    %1552 = vmatpush1.msra.mxu0 0.0
    %1553 = vmatprep.subr.mxu0 0.0
    %1554 = vmatpush1.msra.mxu0 0.0
    %1555 = vmatprep.subr.mxu0 0.0
    %1556 = vmatpush1.msra.mxu0 0.0
    %1557 = vmatprep.subr.mxu0 0.0
    %1558 = vmatpush1.msra.mxu0 0.0
    %1559 = vmatprep.subr.mxu0 0.0
    %1560 = vmatpush1.msra.mxu0 0.0
    %1561 = vmatprep.subr.mxu0 0.0
    %1562 = vmatpush1.msra.mxu0 0.0
    %1563 = vmatprep.subr.mxu0 0.0
    %1564 = vmatpush1.msra.mxu0 0.0
    %1565 = vmatprep.subr.mxu0 0.0
    %1566 = vmatpush1.msra.mxu0 0.0
    %1567 = vmatprep.subr.mxu0 0.0
    %1568 = vmatpush1.msra.mxu0 0.0
    %1569 = vmatprep.mubr.f32.mxu0 0.0
    %1570 = vmatmul.mubr.f32.gmra.mrb[0].mxu0 %v1244
    %v1571 = vpop.f32.mrb[0].mxu0
    %v1572 = vadd.f32 0.0, %v1571
    %v1573 = vpop.f32.mrb[0].mxu0
    %1574 = vdwg.mxu0
    %v1575 = vsub.f32 %v1504, %v1572
    %1576 = vst [vmem:[#allocation13] sm:$0xff] %v1575
    // Predicated region
    $region70: #{tpu_custom_call.1} parent=1 // pred_check
      _
    $region71: #{tpu_custom_call.1} parent=1 // pred_check_branch
      %1578 = sbr.rel (0) target = $region73
    $region72: #{tpu_custom_call.1} parent=1 // pred_region
      %s1580 = ssub.s32 128, 128
      %1581 = vsyncadd [#allocation4], %s1580
      %s1583 = sshll.u32 [#allocation13], 4
      %s1584 = int_to_ptr.vmem [resolvable:$true] %s1583
      %1586 = dma.vmem_to_hbm [thread:$0]  %s1584, 128, %s11, [#allocation4]
    $region73: #{tpu_custom_call.1} parent=1 // pred_fallthru
      _
    // Predicated region
    $region74: #{tpu_custom_call.1} parent=1 // pred_check
      _
    $region75: #{tpu_custom_call.1} parent=1 // pred_check_branch
      %1588 = sbr.rel (0) target = $region77
    $region76: #{tpu_custom_call.1} parent=1 // pred_region
      %1589 = dma.done [#allocation4], 128
    $region77: #{tpu_custom_call.1} parent=1 // pred_fallthru
      _
    %1590 = vsyncpa [#allocation3], 1
    %1591 = vsyncpa [#allocation6], 1
    %1592 = vsyncpa [#allocation9], 1
    %1593 = vsyncpa [#allocation12], 1
    %1594 = vsyncpa [#allocation4], 1

</llo_original>
